<compile_context>
chip_gen: v7x
topology: tpu7x:2x2x1
jax: 0.10.0
libtpu: 0.0.40
codegen_flags: <defaults>
</compile_context>

<pallas_src>
import functools

import jax
import jax.numpy as jnp
from jax.experimental import pallas as pl
from jax.experimental.pallas import tpu as pltpu

LANE = 128


def ner_head_kernel(h_ref, w1_ref, b1_ref, w2p_ref, b2p_ref, out_ref):
    # Hidden rows arrive as f32 (single HBM read); cast to bf16 in VMEM right
    # before the MXU.  First matmul accumulates in f32.
    h = h_ref[...].astype(jnp.bfloat16)
    z = jnp.dot(h, w1_ref[...], preferred_element_type=jnp.float32) + b1_ref[...]
    z = jnp.maximum(z, 0.0)                                   # ReLU (f32 VPU)
    # Folded Linear2 @ prototypes, bf16 x bf16 on the MXU, f32 accumulation,
    # lane-dense (tm, 128) output slab.
    out_ref[...] = (jnp.dot(z.astype(jnp.bfloat16), w2p_ref[...],
                            preferred_element_type=jnp.float32)
                    + b2p_ref[...])


def phi_forward(last_hidden_state, params, *, tm=128):
    """last_hidden_state: [B, S, E] f32 (BERT output). Returns [B, S, num_classes]."""
    B, S, E = last_hidden_state.shape
    M = B * S
    H = params["w1"].shape[1]
    C = params["p"].shape[1]

    # --- offline weight packing (tiny tensors, one-time) -------------------
    # Fold the prototype matmul into Linear2 (exact: no dropout in between).
    w2p = params["w2"] @ params["p"]                    # [H, C] f32
    b2p = params["b2"] @ params["p"]                    # [1, C] f32
    # Zero-pad the output dim to a full 128-lane slab -> unmasked stores.
    c_pad = pl.cdiv(C, LANE) * LANE
    w2p = jnp.pad(w2p, ((0, 0), (0, c_pad - C))).astype(jnp.bfloat16)
    b2p = jnp.pad(b2p, ((0, 0), (0, c_pad - C)))        # bias stays f32

    w1 = params["w1"].astype(jnp.bfloat16)              # [E, H] bf16
    b1 = params["b1"]                                   # [1, H] f32

    # --- hidden rows: no cast, no pad (edge block handles ragged M) --------
    hidden = last_hidden_state.reshape(M, E)            # [M, E] f32
    grid_m = pl.cdiv(M, tm)
    m_pad = grid_m * tm                                 # padded output rows only

    full = lambda shape: pl.BlockSpec(shape, lambda i: (0, 0))
    rows = lambda c: pl.BlockSpec((tm, c), lambda i: (i, 0))

    out = pl.pallas_call(
        ner_head_kernel,
        out_shape=jax.ShapeDtypeStruct((m_pad, c_pad), jnp.float32),
        grid=(grid_m,),
        in_specs=[rows(E),                # hidden rows, streamed per grid step
                  full((E, H)),           # W1 (resident, bf16)
                  full((1, H)),           # b1 (f32)
                  full((H, c_pad)),       # W2 @ prototypes, lane-padded bf16
                  full((1, c_pad))],      # b2 @ prototypes, lane-padded f32
        out_specs=rows(c_pad),
        compiler_params=pltpu.CompilerParams(
            dimension_semantics=("parallel",)),
    )(hidden, w1, b1, w2p, b2p)

    return out[:M, :C].reshape(B, S, C)


def init_params(key, embedding_dim, num_classes, hidden_dim=256, proto_dim=8):
    """PyTorch-nn.Linear-style init (uniform +/- 1/sqrt(fan_in)).
    Linear weights stored pre-transposed as [in, out]; prototypes.weight is
    naturally [proto_dim, num_classes] and is used as-is (forward: x @ weight)."""
    def linear(key, fan_in, fan_out):
        kw, kb = jax.random.split(key)
        bound = 1.0 / jnp.sqrt(fan_in)
        w = jax.random.uniform(kw, (fan_in, fan_out), jnp.float32, -bound, bound)
        b = jax.random.uniform(kb, (1, fan_out), jnp.float32, -bound, bound)
        return w, b

    k1, k2, k3 = jax.random.split(key, 3)
    params = {}
    params["w1"], params["b1"] = linear(k1, embedding_dim, hidden_dim)   # Linear(E, 256)
    params["w2"], params["b2"] = linear(k2, hidden_dim, proto_dim)       # Linear(256, P)
    bound = 1.0 / jnp.sqrt(num_classes)                                  # nn.Linear(C, P).weight -> [P, C]
    params["p"] = jax.random.uniform(k3, (proto_dim, num_classes),
                                     jnp.float32, -bound, bound)
    return params


def reference_forward(last_hidden_state, params):
    """Pure-JAX reference (dropout == identity).  First matmul uses the same
    bf16 input cast as the kernel; second matmul / prototype matmul stay f32."""
    B, S, E = last_hidden_state.shape
    C = params["p"].shape[1]
    h = last_hidden_state.reshape(B * S, E).astype(jnp.bfloat16)
    w1 = params["w1"].astype(jnp.bfloat16)
    z = jnp.dot(h, w1, preferred_element_type=jnp.float32) + params["b1"]
    z = jnp.maximum(z, 0.0)
    e = jnp.dot(z, params["w2"], preferred_element_type=jnp.float32) + params["b2"]
    logits = jnp.dot(e, params["p"], preferred_element_type=jnp.float32)
    return logits.reshape(B, S, C)


if __name__ == "__main__":
    # Small shapes consistent with the module: batch=2, seq=250 (non-multiple
    # of the row tile, exercising the edge-block path), E=768 (BERT hidden
    # size), hidden=256, prototype_embeddings_dim=8, num_classes=5.
    B, S, E = 2, 250, 768
    HIDDEN, PROTO, N_CLASSES = 256, 8, 5

    key = jax.random.PRNGKey(0)
    k_h, k_p = jax.random.split(key)

    # synthetic stand-in for base_model(**inputs).last_hidden_state  [B, S, E]
    last_hidden_state = jax.random.normal(k_h, (B, S, E), jnp.float32)
    params = init_params(k_p, E, N_CLASSES, hidden_dim=HIDDEN, proto_dim=PROTO)

    run = jax.jit(functools.partial(phi_forward, tm=128))
    out = run(last_hidden_state, params)
    jax.block_until_ready(out)

    ref = reference_forward(last_hidden_state, params)
    assert out.shape == (B, S, N_CLASSES)
    assert jnp.allclose(out, ref, atol=3e-3, rtol=3e-3)

    print("KERNEL_OK")
</pallas_src>

<mosaic_0001>
module attributes {stable_mosaic.version = 11 : i64} {
  func.func @ner_head_kernel(%arg0: i32, %arg1: memref<128x768xf32, #tpu.memory_space<vmem>>, %arg2: memref<768x256xbf16, #tpu.memory_space<vmem>>, %arg3: memref<1x256xf32, #tpu.memory_space<vmem>>, %arg4: memref<256x128xbf16, #tpu.memory_space<vmem>>, %arg5: memref<1x128xf32, #tpu.memory_space<vmem>>, %arg6: memref<128x128xf32, #tpu.memory_space<vmem>>) attributes {dimension_semantics = [#tpu.dimension_semantics<parallel>], iteration_bounds = array<i64: 4>, scalar_prefetch = 0 : i64, scratch_operands = 0 : i64, tpu.core_type = #tpu.core_type<tc>, window_params = [{transform_indices = @transform_0, window_bounds = array<i64: 128, 768>}, {pipeline_mode = #tpu.pipeline_mode<synchronous>, transform_indices = @transform_1, window_bounds = array<i64: 768, 256>}, {pipeline_mode = #tpu.pipeline_mode<synchronous>, transform_indices = @transform_2, window_bounds = array<i64: 1, 256>}, {pipeline_mode = #tpu.pipeline_mode<synchronous>, transform_indices = @transform_3, window_bounds = array<i64: 256, 128>}, {pipeline_mode = #tpu.pipeline_mode<synchronous>, transform_indices = @transform_4, window_bounds = array<i64: 1, 128>}, {transform_indices = @transform_5, window_bounds = array<i64: 128, 128>}]} {
    %c0 = arith.constant 0 : index
    %c0_0 = arith.constant 0 : index
    %0 = vector.load %arg1[%c0, %c0_0] : memref<128x768xf32, #tpu.memory_space<vmem>>, vector<128x768xf32>
    %1 = arith.truncf %0 : vector<128x768xf32> to vector<128x768xbf16>
    %c0_1 = arith.constant 0 : index
    %c0_2 = arith.constant 0 : index
    %2 = vector.load %arg2[%c0_1, %c0_2] : memref<768x256xbf16, #tpu.memory_space<vmem>>, vector<768x256xbf16>
    %cst = arith.constant dense<0.000000e+00> : vector<128x256xf32>
    %3 = tpu.matmul %1, %2, %cst {dimension_numbers = #tpu.dot_dimension_numbers<[1], [0], [0], [1], [0, 0, 1, 1], [], []>} : vector<128x768xbf16>, vector<768x256xbf16>, vector<128x256xf32> -> vector<128x256xf32>
    %c0_3 = arith.constant 0 : index
    %c0_4 = arith.constant 0 : index
    %4 = vector.load %arg3[%c0_3, %c0_4] : memref<1x256xf32, #tpu.memory_space<vmem>>, vector<1x256xf32>
    %5 = vector.broadcast %4 : vector<1x256xf32> to vector<128x256xf32>
    %6 = arith.addf %3, %5 : vector<128x256xf32>
    %cst_5 = arith.constant 0.000000e+00 : f32
    %7 = vector.broadcast %cst_5 : f32 to vector<128x256xf32>
    %8 = arith.maximumf %6, %7 : vector<128x256xf32>
    %9 = arith.truncf %8 : vector<128x256xf32> to vector<128x256xbf16>
    %c0_6 = arith.constant 0 : index
    %c0_7 = arith.constant 0 : index
    %10 = vector.load %arg4[%c0_6, %c0_7] : memref<256x128xbf16, #tpu.memory_space<vmem>>, vector<256x128xbf16>
    %cst_8 = arith.constant dense<0.000000e+00> : vector<128x128xf32>
    %11 = tpu.matmul %9, %10, %cst_8 {dimension_numbers = #tpu.dot_dimension_numbers<[1], [0], [0], [1], [0, 0, 1, 1], [], []>} : vector<128x256xbf16>, vector<256x128xbf16>, vector<128x128xf32> -> vector<128x128xf32>
    %c0_9 = arith.constant 0 : index
    %c0_10 = arith.constant 0 : index
    %12 = vector.load %arg5[%c0_9, %c0_10] : memref<1x128xf32, #tpu.memory_space<vmem>>, vector<1x128xf32>
    %13 = vector.broadcast %12 : vector<1x128xf32> to vector<128x128xf32>
    %14 = arith.addf %11, %13 : vector<128x128xf32>
    %c0_11 = arith.constant 0 : index
    %c0_12 = arith.constant 0 : index
    %15 = vector.load %arg6[%c0_11, %c0_12] : memref<128x128xf32, #tpu.memory_space<vmem>>, vector<128x128xf32>
    tpu.vector_store %arg6[%c0_11, %c0_12], %14 {strides = array<i32>} : memref<128x128xf32, #tpu.memory_space<vmem>>, vector<128x128xf32>,
    return
  }
  func.func @transform_0(%arg0: i32) -> (i32, i32) {
    %c0_i32 = arith.constant 0 : i32
    %c0_i32_0 = arith.constant 0 : i32
    return %arg0, %c0_i32 : i32, i32
  }
  func.func @transform_1(%arg0: i32) -> (i32, i32) {
    %c0_i32 = arith.constant 0 : i32
    %c0_i32_0 = arith.constant 0 : i32
    %c0_i32_1 = arith.constant 0 : i32
    return %c0_i32, %c0_i32_0 : i32, i32
  }
  func.func @transform_2(%arg0: i32) -> (i32, i32) {
    %c0_i32 = arith.constant 0 : i32
    %c0_i32_0 = arith.constant 0 : i32
    %c0_i32_1 = arith.constant 0 : i32
    return %c0_i32, %c0_i32_0 : i32, i32
  }
  func.func @transform_3(%arg0: i32) -> (i32, i32) {
    %c0_i32 = arith.constant 0 : i32
    %c0_i32_0 = arith.constant 0 : i32
    %c0_i32_1 = arith.constant 0 : i32
    return %c0_i32, %c0_i32_0 : i32, i32
  }
  func.func @transform_4(%arg0: i32) -> (i32, i32) {
    %c0_i32 = arith.constant 0 : i32
    %c0_i32_0 = arith.constant 0 : i32
    %c0_i32_1 = arith.constant 0 : i32
    return %c0_i32, %c0_i32_0 : i32, i32
  }
  func.func @transform_5(%arg0: i32) -> (i32, i32) {
    %c0_i32 = arith.constant 0 : i32
    %c0_i32_0 = arith.constant 0 : i32
    return %arg0, %c0_i32 : i32, i32
  }
}

</mosaic_0001>

<llo_original>
// kernel: phi_forward.1
$region0: #{phi_forward.1}
  #allocation0 [shape = 'u32[]', space=smem, size = 0x4, offset = 0x4, fixed_abs, tag = 'smem constant byte address 0x4 - core index']
  #allocation1 [shape = 'u32[144,128]{1,0:T(1,128)}', space=vmem, size = 0x12000, scoped, tag = 'internal scratch']
  %s0 = inlined_call_operand.vmem [shape: f32[500,768], index: 0, kind: input, shape index: {}]
  %s1 = inlined_call_operand.vmem [shape: bf16[768,256], index: 1, kind: input, shape index: {}]
  %s2 = inlined_call_operand.vmem [shape: f32[1,256], index: 2, kind: input, shape index: {}]
  %s3 = inlined_call_operand.vmem [shape: bf16[256,128], index: 3, kind: input, shape index: {}]
  %s4 = inlined_call_operand.vmem [shape: f32[1,128], index: 4, kind: input, shape index: {}]
  %s5 = inlined_call_operand.vmem [shape: f32[512,128], index: 5, kind: output, shape index: {}]
  %s6 = sld [smem:[#allocation0]]
  $region53: #{phi_forward.1} parent=0
    _
  %s8 = ssub.s32 1, %s6
  %s9 = scalar_select 0, %s8, %s6
  loop: start=0, step=1, limit=6
  $region2: #{phi_forward.1} parent=0 // loop_pre_header
    _
  $region3: #{phi_forward.1} parent=0 // loop_header
    %s11 = sphi 0, %s15
    %p12 = scmp.ge.s32.totalorder %s11, 6
    %s21 = sphi 0, %s23
    %s24 = sphi 0, %s21
    %s25 = sphi 0, %s24
    %s41 = sphi 0, %s25
    %s45 = sphi 0, %s45
    %s47 = sphi 0, %s45
    %s48 = sphi 0, %s47
    %s62 = sphi 0, %s48
    %s66 = sphi 0, %s66
    %s68 = sphi 0, %s66
    %s69 = sphi 0, %s68
    %s83 = sphi 0, %s69
    %s87 = sphi 0, %s87
    %s89 = sphi 0, %s87
    %s90 = sphi 0, %s89
    %s104 = sphi 0, %s90
    %s108 = sphi 0, %s108
    %s110 = sphi 0, %s108
    %s111 = sphi 0, %s110
    %s125 = sphi 0, %s111
    %s131 = sphi 0, %s133
    %s134 = sphi 0, %s131
    %s135 = sphi 0, %s134
    %s151 = sphi 0, %s135
  $region4: #{phi_forward.1} parent=0 // loop_header_branch
    %14 = sbr.rel (%p12) target = $region8
  $region5: #{phi_forward.1} parent=0 // loop_body
    %s16 = ssub.s32 %s11, 1
    %s17 = ssub.s32 %s11, 2
    %s18 = sadd.s32 %s11, 1
    %s19 = ssub.s32 %s11, %s18
    %p20 = scmp.eq.s32.totalorder %s19, 0
    %s22 = sadd.s32 %s21, 1
    %s23 = scalar_select %p20, %s21, %s22
    %p26 = pneg %p20
    %p27 = scmp.eq.s32.totalorder %s11, 3
    %p28 = por %p26, %p27
    %p29 = scmp.ne.s32.totalorder %s21, %s24
    %p30 = scmp.eq.s32.totalorder %s11, 0
    %p31 = por %p29, %p30
    %p32 = scmp.ne.s32.totalorder %s21, %s24
    %p33 = scmp.eq.s32.totalorder %s16, 3
    %p34 = por %p32, %p33
    %p35 = scmp.ne.s32.totalorder %s24, %s25
    %p36 = scmp.eq.s32.totalorder %s16, 0
    %p37 = por %p35, %p36
    %p38 = scmp.ne.s32.totalorder %s24, %s25
    %p39 = scmp.eq.s32.totalorder %s17, 3
    %p40 = por %p38, %p39
    %p42 = scmp.ne.s32.totalorder %s25, %s41
    %p43 = scmp.eq.s32.totalorder %s17, 0
    %p44 = por %p42, %p43
    %s46 = sadd.s32 %s45, 1
    %p49 = scmp.eq.s32.totalorder %s11, 3
    %p50 = scmp.ne.s32.totalorder %s45, %s47
    %p51 = scmp.eq.s32.totalorder %s11, 0
    %p52 = por %p50, %p51
    %p53 = scmp.ne.s32.totalorder %s45, %s47
    %p54 = scmp.eq.s32.totalorder %s16, 3
    %p55 = por %p53, %p54
    %p56 = scmp.ne.s32.totalorder %s47, %s48
    %p57 = scmp.eq.s32.totalorder %s16, 0
    %p58 = por %p56, %p57
    %p59 = scmp.ne.s32.totalorder %s47, %s48
    %p60 = scmp.eq.s32.totalorder %s17, 3
    %p61 = por %p59, %p60
    %p63 = scmp.ne.s32.totalorder %s48, %s62
    %p64 = scmp.eq.s32.totalorder %s17, 0
    %p65 = por %p63, %p64
    %s67 = sadd.s32 %s66, 1
    %p70 = scmp.eq.s32.totalorder %s11, 3
    %p71 = scmp.ne.s32.totalorder %s66, %s68
    %p72 = scmp.eq.s32.totalorder %s11, 0
    %p73 = por %p71, %p72
    %p74 = scmp.ne.s32.totalorder %s66, %s68
    %p75 = scmp.eq.s32.totalorder %s16, 3
    %p76 = por %p74, %p75
    %p77 = scmp.ne.s32.totalorder %s68, %s69
    %p78 = scmp.eq.s32.totalorder %s16, 0
    %p79 = por %p77, %p78
    %p80 = scmp.ne.s32.totalorder %s68, %s69
    %p81 = scmp.eq.s32.totalorder %s17, 3
    %p82 = por %p80, %p81
    %p84 = scmp.ne.s32.totalorder %s69, %s83
    %p85 = scmp.eq.s32.totalorder %s17, 0
    %p86 = por %p84, %p85
    %s88 = sadd.s32 %s87, 1
    %p91 = scmp.eq.s32.totalorder %s11, 3
    %p92 = scmp.ne.s32.totalorder %s87, %s89
    %p93 = scmp.eq.s32.totalorder %s11, 0
    %p94 = por %p92, %p93
    %p95 = scmp.ne.s32.totalorder %s87, %s89
    %p96 = scmp.eq.s32.totalorder %s16, 3
    %p97 = por %p95, %p96
    %p98 = scmp.ne.s32.totalorder %s89, %s90
    %p99 = scmp.eq.s32.totalorder %s16, 0
    %p100 = por %p98, %p99
    %p101 = scmp.ne.s32.totalorder %s89, %s90
    %p102 = scmp.eq.s32.totalorder %s17, 3
    %p103 = por %p101, %p102
    %p105 = scmp.ne.s32.totalorder %s90, %s104
    %p106 = scmp.eq.s32.totalorder %s17, 0
    %p107 = por %p105, %p106
    %s109 = sadd.s32 %s108, 1
    %p112 = scmp.eq.s32.totalorder %s11, 3
    %p113 = scmp.ne.s32.totalorder %s108, %s110
    %p114 = scmp.eq.s32.totalorder %s11, 0
    %p115 = por %p113, %p114
    %p116 = scmp.ne.s32.totalorder %s108, %s110
    %p117 = scmp.eq.s32.totalorder %s16, 3
    %p118 = por %p116, %p117
    %p119 = scmp.ne.s32.totalorder %s110, %s111
    %p120 = scmp.eq.s32.totalorder %s16, 0
    %p121 = por %p119, %p120
    %p122 = scmp.ne.s32.totalorder %s110, %s111
    %p123 = scmp.eq.s32.totalorder %s17, 3
    %p124 = por %p122, %p123
    %p126 = scmp.ne.s32.totalorder %s111, %s125
    %p127 = scmp.eq.s32.totalorder %s17, 0
    %p128 = por %p126, %p127
    %s129 = ssub.s32 %s11, %s18
    %p130 = scmp.eq.s32.totalorder %s129, 0
    %s132 = sadd.s32 %s131, 1
    %s133 = scalar_select %p130, %s131, %s132
    %p136 = pneg %p130
    %p137 = scmp.eq.s32.totalorder %s11, 3
    %p138 = por %p136, %p137
    %p139 = scmp.ne.s32.totalorder %s131, %s134
    %p140 = scmp.eq.s32.totalorder %s11, 0
    %p141 = por %p139, %p140
    %p142 = scmp.ne.s32.totalorder %s131, %s134
    %p143 = scmp.eq.s32.totalorder %s16, 3
    %p144 = por %p142, %p143
    %p145 = scmp.ne.s32.totalorder %s134, %s135
    %p146 = scmp.eq.s32.totalorder %s16, 0
    %p147 = por %p145, %p146
    %p148 = scmp.ne.s32.totalorder %s134, %s135
    %p149 = scmp.eq.s32.totalorder %s17, 3
    %p150 = por %p148, %p149
    %p152 = scmp.ne.s32.totalorder %s135, %s151
    %p153 = scmp.eq.s32.totalorder %s17, 0
    %p154 = por %p152, %p153
    %p155 = scmp.le.s32.totalorder 1, %s11
    %p156 = scmp.lt.s32.totalorder %s11, 5
    %p157 = pnand %p155, %p156
    %p158 = pneg %p157
    // Predicated region
    $region9: #{phi_forward.1} parent=5 // pred_check
      _
    $region10: #{phi_forward.1} parent=5 // pred_check_branch
      %160 = sbr.rel (%p157) target = $region12
    $region11: #{phi_forward.1} parent=5 // pred_region
      %s161 = ssub.s32 %s11, 1
      // Predicated region
      $region13: #{phi_forward.1} parent=11 // pred_check
        %p162 = pneg %p58
      $region14: #{phi_forward.1} parent=11 // pred_check_branch
        %164 = sbr.rel (%p162) target = $region16
      $region15: #{phi_forward.1} parent=11 // pred_region
        _
      $region16: #{phi_forward.1} parent=11 // pred_fallthru
        _
      // Predicated region
      $region17: #{phi_forward.1} parent=11 // pred_check
        %p165 = pneg %p79
      $region18: #{phi_forward.1} parent=11 // pred_check_branch
        %167 = sbr.rel (%p165) target = $region20
      $region19: #{phi_forward.1} parent=11 // pred_region
        _
      $region20: #{phi_forward.1} parent=11 // pred_fallthru
        _
      // Predicated region
      $region21: #{phi_forward.1} parent=11 // pred_check
        %p168 = pneg %p100
      $region22: #{phi_forward.1} parent=11 // pred_check_branch
        %170 = sbr.rel (%p168) target = $region24
      $region23: #{phi_forward.1} parent=11 // pred_region
        _
      $region24: #{phi_forward.1} parent=11 // pred_fallthru
        _
      // Predicated region
      $region25: #{phi_forward.1} parent=11 // pred_check
        %p171 = pneg %p121
      $region26: #{phi_forward.1} parent=11 // pred_check_branch
        %173 = sbr.rel (%p171) target = $region28
      $region27: #{phi_forward.1} parent=11 // pred_region
        _
      $region28: #{phi_forward.1} parent=11 // pred_fallthru
        _
    $region12: #{phi_forward.1} parent=5 // pred_fallthru
      _
    %p174 = scmp.lt.s32.totalorder %s11, 4
    // Predicated region
    $region29: #{phi_forward.1} parent=5 // pred_check
      %p175 = pneg %p174
    $region30: #{phi_forward.1} parent=5 // pred_check_branch
      %177 = sbr.rel (%p175) target = $region32
    $region31: #{phi_forward.1} parent=5 // pred_region
      // Predicated region
      $region33: #{phi_forward.1} parent=31 // pred_check
        %p178 = pneg %p31
      $region34: #{phi_forward.1} parent=31 // pred_check_branch
        %180 = sbr.rel (%p178) target = $region36
      $region35: #{phi_forward.1} parent=31 // pred_region
        %s181 = smul.u32 16, %s11
        %s182 = ssub.s32 63, %s181
        %p183 = scmp.lt.s32.totalorder %s182, 16
        %s184 = scalar_select %p183, %s182, 16
        %s185 = smul.u32 128, %s184
        %s186 = smul.u32 %s185, 6
        %p187 = scmp.lt.s32.totalorder %s181, 62
        %s188 = scalar_select %p187, %s181, 62
        %s189 = smul.addr %s188, 6
        %s190 = smul.addr %s189, 8
        %s191 = scalar_lea.vmem %s0, %s190
        %s192 = smul.u32 16, %s11
        %s193 = ssub.s32 63, %s192
        %p194 = scmp.lt.s32.totalorder %s193, 16
        %s195 = scalar_select %p194, %s193, 16
        %s196 = smul.u32 128, %s195
        %s197 = smul.u32 %s196, 6
      $region36: #{phi_forward.1} parent=31 // pred_fallthru
        _
    $region32: #{phi_forward.1} parent=5 // pred_fallthru
      _
    %p198 = scmp.le.s32.totalorder 1, %s11
    %p199 = scmp.lt.s32.totalorder %s11, 5
    %p200 = pnand %p198, %p199
    %p201 = pneg %p200
    // Predicated region
    $region37: #{phi_forward.1} parent=5 // pred_check
      _
    $region38: #{phi_forward.1} parent=5 // pred_check_branch
      %203 = sbr.rel (%p200) target = $region40
    $region39: #{phi_forward.1} parent=5 // pred_region
      %s204 = ssub.s32 %s11, 1
      %s205 = smul.u32 16, %s16
      %s206 = ssub.s32 63, %s205
      %p207 = scmp.lt.s32.totalorder %s206, 16
      %s208 = scalar_select %p207, %s206, 16
      %s209 = smul.u32 128, %s208
      %s210 = smul.u32 %s209, 6
      %p211 = scmp.lt.s32.totalorder %s205, 62
      %s212 = scalar_select %p211, %s205, 62
      %s213 = smul.addr %s212, 6
      %s214 = smul.addr %s213, 8
      %s215 = scalar_lea.vmem %s0, %s214
      %p216 = pneg %p37
      %p217 = pneg %p34
      %p218 = pneg %p58
      %p219 = pneg %p55
      %p220 = pneg %p79
      %p221 = pneg %p76
      %p222 = pneg %p100
      %p223 = pneg %p97
      %p224 = pneg %p121
      %p225 = pneg %p118
      %p226 = pneg %p147
      %p227 = pneg %p144
      %s228 = smul.u32 16, %s16
      %p229 = scmp.lt.s32.totalorder %s228, 63
      %s230 = scalar_select %p229, %s228, 63
      %s231 = smul.addr %s230, 8
      %s232 = scalar_lea.vmem %s5, %s231
      %s233 = smul.u32 16, %s16
      %s234 = ssub.s32 63, %s233
      %p235 = scmp.lt.s32.totalorder %s234, 16
      %s236 = scalar_select %p235, %s234, 16
      %s237 = smul.u32 128, %s236
      %s238 = smul.u32 %s237, 6
      %p239 = scmp.lt.s32.totalorder %s233, 62
      %s240 = scalar_select %p239, %s233, 62
      %s241 = smul.addr %s240, 6
      %s242 = smul.addr %s241, 8
      %s243 = scalar_lea.vmem %s0, %s242
      %s244 = smul.u32 16, %s16
      %s245 = ssub.s32 63, %s244
      %p246 = scmp.lt.s32.totalorder %s245, 16
      %s247 = scalar_select %p246, %s245, 16
      %s248 = smul.u32 128, %s247
      %s249 = smul.u32 %s248, 6
      %s250 = smul.u32 16, %s16
      %p251 = scmp.lt.s32.totalorder %s250, 63
      %s252 = scalar_select %p251, %s250, 63
      %s253 = smul.addr %s252, 8
      %s254 = scalar_lea.vmem %s5, %s253
      %s255 = smul.u32 16, %s16
      %v257 = vld [vmem:[%s243] sm:$0xff]
      %v258 = vld [vmem:[%s243 + $0x8] sm:$0xff]
      %v259 = vld [vmem:[%s243 + $0x10] sm:$0xff]
      %v260 = vld [vmem:[%s243 + $0x18] sm:$0xff]
      %v261 = vld [vmem:[%s243 + $0x20] sm:$0xff]
      %v262 = vld [vmem:[%s243 + $0x28] sm:$0xff]
      %v263 = vld [vmem:[%s243 + $0x30] sm:$0xff]
      %v264 = vld [vmem:[%s243 + $0x38] sm:$0xff]
      %v265 = vld [vmem:[%s243 + $0x40] sm:$0xff]
      %v266 = vld [vmem:[%s243 + $0x48] sm:$0xff]
      %v267 = vld [vmem:[%s243 + $0x50] sm:$0xff]
      %v268 = vld [vmem:[%s243 + $0x58] sm:$0xff]
      %v269 = vld [vmem:[%s243 + $0x60] sm:$0xff]
      %v270 = vld [vmem:[%s243 + $0x68] sm:$0xff]
      %v271 = vld [vmem:[%s243 + $0x70] sm:$0xff]
      %v272 = vld [vmem:[%s243 + $0x78] sm:$0xff]
      %v273 = vld [vmem:[%s243 + $0x80] sm:$0xff]
      %v274 = vld [vmem:[%s243 + $0x88] sm:$0xff]
      %v275 = vld [vmem:[%s243 + $0x90] sm:$0xff]
      %v276 = vld [vmem:[%s243 + $0x98] sm:$0xff]
      %v277 = vld [vmem:[%s243 + $0xa0] sm:$0xff]
      %v278 = vld [vmem:[%s243 + $0xa8] sm:$0xff]
      %v279 = vld [vmem:[%s243 + $0xb0] sm:$0xff]
      %v280 = vld [vmem:[%s243 + $0xb8] sm:$0xff]
      %v281 = vld [vmem:[%s243 + $0xc0] sm:$0xff]
      %v282 = vld [vmem:[%s243 + $0xc8] sm:$0xff]
      %v283 = vld [vmem:[%s243 + $0xd0] sm:$0xff]
      %v284 = vld [vmem:[%s243 + $0xd8] sm:$0xff]
      %v285 = vld [vmem:[%s243 + $0xe0] sm:$0xff]
      %v286 = vld [vmem:[%s243 + $0xe8] sm:$0xff]
      %v287 = vld [vmem:[%s243 + $0xf0] sm:$0xff]
      %v288 = vld [vmem:[%s243 + $0xf8] sm:$0xff]
      %v289 = vld [vmem:[%s243 + $0x100] sm:$0xff]
      %v290 = vld [vmem:[%s243 + $0x108] sm:$0xff]
      %v291 = vld [vmem:[%s243 + $0x110] sm:$0xff]
      %v292 = vld [vmem:[%s243 + $0x118] sm:$0xff]
      %v293 = vld [vmem:[%s243 + $0x120] sm:$0xff]
      %v294 = vld [vmem:[%s243 + $0x128] sm:$0xff]
      %v295 = vld [vmem:[%s243 + $0x130] sm:$0xff]
      %v296 = vld [vmem:[%s243 + $0x138] sm:$0xff]
      %v297 = vld [vmem:[%s243 + $0x140] sm:$0xff]
      %v298 = vld [vmem:[%s243 + $0x148] sm:$0xff]
      %v299 = vld [vmem:[%s243 + $0x150] sm:$0xff]
      %v300 = vld [vmem:[%s243 + $0x158] sm:$0xff]
      %v301 = vld [vmem:[%s243 + $0x160] sm:$0xff]
      %v302 = vld [vmem:[%s243 + $0x168] sm:$0xff]
      %v303 = vld [vmem:[%s243 + $0x170] sm:$0xff]
      %v304 = vld [vmem:[%s243 + $0x178] sm:$0xff]
      %v305 = vld [vmem:[%s243 + $0x180] sm:$0xff]
      %v306 = vld [vmem:[%s243 + $0x188] sm:$0xff]
      %v307 = vld [vmem:[%s243 + $0x190] sm:$0xff]
      %v308 = vld [vmem:[%s243 + $0x198] sm:$0xff]
      %v309 = vld [vmem:[%s243 + $0x1a0] sm:$0xff]
      %v310 = vld [vmem:[%s243 + $0x1a8] sm:$0xff]
      %v311 = vld [vmem:[%s243 + $0x1b0] sm:$0xff]
      %v312 = vld [vmem:[%s243 + $0x1b8] sm:$0xff]
      %v313 = vld [vmem:[%s243 + $0x1c0] sm:$0xff]
      %v314 = vld [vmem:[%s243 + $0x1c8] sm:$0xff]
      %v315 = vld [vmem:[%s243 + $0x1d0] sm:$0xff]
      %v316 = vld [vmem:[%s243 + $0x1d8] sm:$0xff]
      %v317 = vld [vmem:[%s243 + $0x1e0] sm:$0xff]
      %v318 = vld [vmem:[%s243 + $0x1e8] sm:$0xff]
      %v319 = vld [vmem:[%s243 + $0x1f0] sm:$0xff]
      %v320 = vld [vmem:[%s243 + $0x1f8] sm:$0xff]
      %v321 = vld [vmem:[%s243 + $0x200] sm:$0xff]
      %v322 = vld [vmem:[%s243 + $0x208] sm:$0xff]
      %v323 = vld [vmem:[%s243 + $0x210] sm:$0xff]
      %v324 = vld [vmem:[%s243 + $0x218] sm:$0xff]
      %v325 = vld [vmem:[%s243 + $0x220] sm:$0xff]
      %v326 = vld [vmem:[%s243 + $0x228] sm:$0xff]
      %v327 = vld [vmem:[%s243 + $0x230] sm:$0xff]
      %v328 = vld [vmem:[%s243 + $0x238] sm:$0xff]
      %v329 = vld [vmem:[%s243 + $0x240] sm:$0xff]
      %v330 = vld [vmem:[%s243 + $0x248] sm:$0xff]
      %v331 = vld [vmem:[%s243 + $0x250] sm:$0xff]
      %v332 = vld [vmem:[%s243 + $0x258] sm:$0xff]
      %v333 = vld [vmem:[%s243 + $0x260] sm:$0xff]
      %v334 = vld [vmem:[%s243 + $0x268] sm:$0xff]
      %v335 = vld [vmem:[%s243 + $0x270] sm:$0xff]
      %v336 = vld [vmem:[%s243 + $0x278] sm:$0xff]
      %v337 = vld [vmem:[%s243 + $0x280] sm:$0xff]
      %v338 = vld [vmem:[%s243 + $0x288] sm:$0xff]
      %v339 = vld [vmem:[%s243 + $0x290] sm:$0xff]
      %v340 = vld [vmem:[%s243 + $0x298] sm:$0xff]
      %v341 = vld [vmem:[%s243 + $0x2a0] sm:$0xff]
      %v342 = vld [vmem:[%s243 + $0x2a8] sm:$0xff]
      %v343 = vld [vmem:[%s243 + $0x2b0] sm:$0xff]
      %v344 = vld [vmem:[%s243 + $0x2b8] sm:$0xff]
      %v345 = vld [vmem:[%s243 + $0x2c0] sm:$0xff]
      %v346 = vld [vmem:[%s243 + $0x2c8] sm:$0xff]
      %v347 = vld [vmem:[%s243 + $0x2d0] sm:$0xff]
      %v348 = vld [vmem:[%s243 + $0x2d8] sm:$0xff]
      %v349 = vld [vmem:[%s243 + $0x2e0] sm:$0xff]
      %v350 = vld [vmem:[%s243 + $0x2e8] sm:$0xff]
      %v351 = vld [vmem:[%s243 + $0x2f0] sm:$0xff]
      %v352 = vld [vmem:[%s243 + $0x2f8] sm:$0xff]
      %v353 = vpack.c.bf16 %v263, %v257
      %v354 = vpack.c.bf16 %v264, %v258
      %v355 = vpack.c.bf16 %v265, %v259
      %v356 = vpack.c.bf16 %v266, %v260
      %v357 = vpack.c.bf16 %v267, %v261
      %v358 = vpack.c.bf16 %v268, %v262
      %v359 = vpack.c.bf16 %v275, %v269
      %v360 = vpack.c.bf16 %v276, %v270
      %v361 = vpack.c.bf16 %v277, %v271
      %v362 = vpack.c.bf16 %v278, %v272
      %v363 = vpack.c.bf16 %v279, %v273
      %v364 = vpack.c.bf16 %v280, %v274
      %v365 = vpack.c.bf16 %v287, %v281
      %v366 = vpack.c.bf16 %v288, %v282
      %v367 = vpack.c.bf16 %v289, %v283
      %v368 = vpack.c.bf16 %v290, %v284
      %v369 = vpack.c.bf16 %v291, %v285
      %v370 = vpack.c.bf16 %v292, %v286
      %v371 = vpack.c.bf16 %v299, %v293
      %v372 = vpack.c.bf16 %v300, %v294
      %v373 = vpack.c.bf16 %v301, %v295
      %v374 = vpack.c.bf16 %v302, %v296
      %v375 = vpack.c.bf16 %v303, %v297
      %v376 = vpack.c.bf16 %v304, %v298
      %v377 = vpack.c.bf16 %v311, %v305
      %v378 = vpack.c.bf16 %v312, %v306
      %v379 = vpack.c.bf16 %v313, %v307
      %v380 = vpack.c.bf16 %v314, %v308
      %v381 = vpack.c.bf16 %v315, %v309
      %v382 = vpack.c.bf16 %v316, %v310
      %v383 = vpack.c.bf16 %v323, %v317
      %v384 = vpack.c.bf16 %v324, %v318
      %v385 = vpack.c.bf16 %v325, %v319
      %v386 = vpack.c.bf16 %v326, %v320
      %v387 = vpack.c.bf16 %v327, %v321
      %v388 = vpack.c.bf16 %v328, %v322
      %v389 = vpack.c.bf16 %v335, %v329
      %v390 = vpack.c.bf16 %v336, %v330
      %v391 = vpack.c.bf16 %v337, %v331
      %v392 = vpack.c.bf16 %v338, %v332
      %v393 = vpack.c.bf16 %v339, %v333
      %v394 = vpack.c.bf16 %v340, %v334
      %v395 = vpack.c.bf16 %v347, %v341
      %v396 = vpack.c.bf16 %v348, %v342
      %v397 = vpack.c.bf16 %v349, %v343
      %v398 = vpack.c.bf16 %v350, %v344
      %v399 = vpack.c.bf16 %v351, %v345
      %v400 = vpack.c.bf16 %v352, %v346
      %v401 = vld [vmem:[%s1] sm:$0xff]
      %v402 = vld [vmem:[%s1 + $0x8] sm:$0xff]
      %v403 = vld [vmem:[%s1 + $0x10] sm:$0xff]
      %v404 = vld [vmem:[%s1 + $0x18] sm:$0xff]
      %v405 = vld [vmem:[%s1 + $0x20] sm:$0xff]
      %v406 = vld [vmem:[%s1 + $0x28] sm:$0xff]
      %v407 = vld [vmem:[%s1 + $0x30] sm:$0xff]
      %v408 = vld [vmem:[%s1 + $0x38] sm:$0xff]
      %v409 = vld [vmem:[%s1 + $0x40] sm:$0xff]
      %v410 = vld [vmem:[%s1 + $0x48] sm:$0xff]
      %v411 = vld [vmem:[%s1 + $0x50] sm:$0xff]
      %v412 = vld [vmem:[%s1 + $0x58] sm:$0xff]
      %v413 = vld [vmem:[%s1 + $0x60] sm:$0xff]
      %v414 = vld [vmem:[%s1 + $0x68] sm:$0xff]
      %v415 = vld [vmem:[%s1 + $0x70] sm:$0xff]
      %v416 = vld [vmem:[%s1 + $0x78] sm:$0xff]
      %v417 = vld [vmem:[%s1 + $0x80] sm:$0xff]
      %v418 = vld [vmem:[%s1 + $0x88] sm:$0xff]
      %v419 = vld [vmem:[%s1 + $0x90] sm:$0xff]
      %v420 = vld [vmem:[%s1 + $0x98] sm:$0xff]
      %v421 = vld [vmem:[%s1 + $0xa0] sm:$0xff]
      %v422 = vld [vmem:[%s1 + $0xa8] sm:$0xff]
      %v423 = vld [vmem:[%s1 + $0xb0] sm:$0xff]
      %v424 = vld [vmem:[%s1 + $0xb8] sm:$0xff]
      %v425 = vld [vmem:[%s1 + $0xc0] sm:$0xff]
      %v426 = vld [vmem:[%s1 + $0xc8] sm:$0xff]
      %v427 = vld [vmem:[%s1 + $0xd0] sm:$0xff]
      %v428 = vld [vmem:[%s1 + $0xd8] sm:$0xff]
      %v429 = vld [vmem:[%s1 + $0xe0] sm:$0xff]
      %v430 = vld [vmem:[%s1 + $0xe8] sm:$0xff]
      %v431 = vld [vmem:[%s1 + $0xf0] sm:$0xff]
      %v432 = vld [vmem:[%s1 + $0xf8] sm:$0xff]
      %v433 = vld [vmem:[%s1 + $0x100] sm:$0xff]
      %v434 = vld [vmem:[%s1 + $0x108] sm:$0xff]
      %v435 = vld [vmem:[%s1 + $0x110] sm:$0xff]
      %v436 = vld [vmem:[%s1 + $0x118] sm:$0xff]
      %v437 = vld [vmem:[%s1 + $0x120] sm:$0xff]
      %v438 = vld [vmem:[%s1 + $0x128] sm:$0xff]
      %v439 = vld [vmem:[%s1 + $0x130] sm:$0xff]
      %v440 = vld [vmem:[%s1 + $0x138] sm:$0xff]
      %v441 = vld [vmem:[%s1 + $0x140] sm:$0xff]
      %v442 = vld [vmem:[%s1 + $0x148] sm:$0xff]
      %v443 = vld [vmem:[%s1 + $0x150] sm:$0xff]
      %v444 = vld [vmem:[%s1 + $0x158] sm:$0xff]
      %v445 = vld [vmem:[%s1 + $0x160] sm:$0xff]
      %v446 = vld [vmem:[%s1 + $0x168] sm:$0xff]
      %v447 = vld [vmem:[%s1 + $0x170] sm:$0xff]
      %v448 = vld [vmem:[%s1 + $0x178] sm:$0xff]
      %v449 = vld [vmem:[%s1 + $0x180] sm:$0xff]
      %v450 = vld [vmem:[%s1 + $0x188] sm:$0xff]
      %v451 = vld [vmem:[%s1 + $0x190] sm:$0xff]
      %v452 = vld [vmem:[%s1 + $0x198] sm:$0xff]
      %v453 = vld [vmem:[%s1 + $0x1a0] sm:$0xff]
      %v454 = vld [vmem:[%s1 + $0x1a8] sm:$0xff]
      %v455 = vld [vmem:[%s1 + $0x1b0] sm:$0xff]
      %v456 = vld [vmem:[%s1 + $0x1b8] sm:$0xff]
      %v457 = vld [vmem:[%s1 + $0x1c0] sm:$0xff]
      %v458 = vld [vmem:[%s1 + $0x1c8] sm:$0xff]
      %v459 = vld [vmem:[%s1 + $0x1d0] sm:$0xff]
      %v460 = vld [vmem:[%s1 + $0x1d8] sm:$0xff]
      %v461 = vld [vmem:[%s1 + $0x1e0] sm:$0xff]
      %v462 = vld [vmem:[%s1 + $0x1e8] sm:$0xff]
      %v463 = vld [vmem:[%s1 + $0x1f0] sm:$0xff]
      %v464 = vld [vmem:[%s1 + $0x1f8] sm:$0xff]
      %v465 = vld [vmem:[%s1 + $0x200] sm:$0xff]
      %v466 = vld [vmem:[%s1 + $0x208] sm:$0xff]
      %v467 = vld [vmem:[%s1 + $0x210] sm:$0xff]
      %v468 = vld [vmem:[%s1 + $0x218] sm:$0xff]
      %v469 = vld [vmem:[%s1 + $0x220] sm:$0xff]
      %v470 = vld [vmem:[%s1 + $0x228] sm:$0xff]
      %v471 = vld [vmem:[%s1 + $0x230] sm:$0xff]
      %v472 = vld [vmem:[%s1 + $0x238] sm:$0xff]
      %v473 = vld [vmem:[%s1 + $0x240] sm:$0xff]
      %v474 = vld [vmem:[%s1 + $0x248] sm:$0xff]
      %v475 = vld [vmem:[%s1 + $0x250] sm:$0xff]
      %v476 = vld [vmem:[%s1 + $0x258] sm:$0xff]
      %v477 = vld [vmem:[%s1 + $0x260] sm:$0xff]
      %v478 = vld [vmem:[%s1 + $0x268] sm:$0xff]
      %v479 = vld [vmem:[%s1 + $0x270] sm:$0xff]
      %v480 = vld [vmem:[%s1 + $0x278] sm:$0xff]
      %v481 = vld [vmem:[%s1 + $0x280] sm:$0xff]
      %v482 = vld [vmem:[%s1 + $0x288] sm:$0xff]
      %v483 = vld [vmem:[%s1 + $0x290] sm:$0xff]
      %v484 = vld [vmem:[%s1 + $0x298] sm:$0xff]
      %v485 = vld [vmem:[%s1 + $0x2a0] sm:$0xff]
      %v486 = vld [vmem:[%s1 + $0x2a8] sm:$0xff]
      %v487 = vld [vmem:[%s1 + $0x2b0] sm:$0xff]
      %v488 = vld [vmem:[%s1 + $0x2b8] sm:$0xff]
      %v489 = vld [vmem:[%s1 + $0x2c0] sm:$0xff]
      %v490 = vld [vmem:[%s1 + $0x2c8] sm:$0xff]
      %v491 = vld [vmem:[%s1 + $0x2d0] sm:$0xff]
      %v492 = vld [vmem:[%s1 + $0x2d8] sm:$0xff]
      %v493 = vld [vmem:[%s1 + $0x2e0] sm:$0xff]
      %v494 = vld [vmem:[%s1 + $0x2e8] sm:$0xff]
      %v495 = vld [vmem:[%s1 + $0x2f0] sm:$0xff]
      %v496 = vld [vmem:[%s1 + $0x2f8] sm:$0xff]
      %v497 = vld [vmem:[%s2] sm:$0x3]
      %v499 = vlaneseq
      %v500 = vshrl.u32 %v499, 7
      %v501 = vsub.s32 0, %v500
      %v502 = vrot.slane %v497, %v501
      %v503 = vlaneseq
      %v504 = vshrl.u32 %v503, 7
      %v505 = vsub.s32 1, %v504
      %v506 = vrot.slane %v497, %v505
      %v605 = vunpack.c.l.b16 %v401
      %v606 = vunpack.c.h.b16 %v401
      %v607 = vunpack.c.l.b16 %v402
      %v608 = vunpack.c.h.b16 %v402
      %v609 = vunpack.c.l.b16 %v403
      %v610 = vunpack.c.h.b16 %v403
      %v611 = vunpack.c.l.b16 %v404
      %v612 = vunpack.c.h.b16 %v404
      %v613 = vunpack.c.l.b16 %v405
      %v614 = vunpack.c.h.b16 %v405
      %v615 = vunpack.c.l.b16 %v406
      %v616 = vunpack.c.h.b16 %v406
      %v617 = vunpack.c.l.b16 %v407
      %v618 = vunpack.c.h.b16 %v407
      %v619 = vunpack.c.l.b16 %v408
      %v620 = vunpack.c.h.b16 %v408
      %v621 = vunpack.c.l.b16 %v409
      %v622 = vunpack.c.h.b16 %v409
      %v623 = vunpack.c.l.b16 %v410
      %v624 = vunpack.c.h.b16 %v410
      %v625 = vunpack.c.l.b16 %v411
      %v626 = vunpack.c.h.b16 %v411
      %v627 = vunpack.c.l.b16 %v412
      %v628 = vunpack.c.h.b16 %v412
      %v629 = vunpack.c.l.b16 %v413
      %v630 = vunpack.c.h.b16 %v413
      %v631 = vunpack.c.l.b16 %v414
      %v632 = vunpack.c.h.b16 %v414
      %v633 = vunpack.c.l.b16 %v415
      %v634 = vunpack.c.h.b16 %v415
      %v635 = vunpack.c.l.b16 %v416
      %v636 = vunpack.c.h.b16 %v416
      %v637 = vunpack.c.l.b16 %v417
      %v638 = vunpack.c.h.b16 %v417
      %v639 = vunpack.c.l.b16 %v418
      %v640 = vunpack.c.h.b16 %v418
      %v641 = vunpack.c.l.b16 %v419
      %v642 = vunpack.c.h.b16 %v419
      %v643 = vunpack.c.l.b16 %v420
      %v644 = vunpack.c.h.b16 %v420
      %v645 = vunpack.c.l.b16 %v421
      %v646 = vunpack.c.h.b16 %v421
      %v647 = vunpack.c.l.b16 %v422
      %v648 = vunpack.c.h.b16 %v422
      %v649 = vunpack.c.l.b16 %v423
      %v650 = vunpack.c.h.b16 %v423
      %v651 = vunpack.c.l.b16 %v424
      %v652 = vunpack.c.h.b16 %v424
      %v653 = vunpack.c.l.b16 %v425
      %v654 = vunpack.c.h.b16 %v425
      %v655 = vunpack.c.l.b16 %v426
      %v656 = vunpack.c.h.b16 %v426
      %v657 = vunpack.c.l.b16 %v427
      %v658 = vunpack.c.h.b16 %v427
      %v659 = vunpack.c.l.b16 %v428
      %v660 = vunpack.c.h.b16 %v428
      %v661 = vunpack.c.l.b16 %v429
      %v662 = vunpack.c.h.b16 %v429
      %v663 = vunpack.c.l.b16 %v430
      %v664 = vunpack.c.h.b16 %v430
      %v665 = vunpack.c.l.b16 %v431
      %v666 = vunpack.c.h.b16 %v431
      %v667 = vunpack.c.l.b16 %v432
      %v668 = vunpack.c.h.b16 %v432
      %v669 = vunpack.c.l.b16 %v433
      %v670 = vunpack.c.h.b16 %v433
      %v671 = vunpack.c.l.b16 %v434
      %v672 = vunpack.c.h.b16 %v434
      %v673 = vunpack.c.l.b16 %v435
      %v674 = vunpack.c.h.b16 %v435
      %v675 = vunpack.c.l.b16 %v436
      %v676 = vunpack.c.h.b16 %v436
      %v677 = vunpack.c.l.b16 %v437
      %v678 = vunpack.c.h.b16 %v437
      %v679 = vunpack.c.l.b16 %v438
      %v680 = vunpack.c.h.b16 %v438
      %v681 = vunpack.c.l.b16 %v439
      %v682 = vunpack.c.h.b16 %v439
      %v683 = vunpack.c.l.b16 %v440
      %v684 = vunpack.c.h.b16 %v440
      %v685 = vunpack.c.l.b16 %v441
      %v686 = vunpack.c.h.b16 %v441
      %v687 = vunpack.c.l.b16 %v442
      %v688 = vunpack.c.h.b16 %v442
      %v689 = vunpack.c.l.b16 %v443
      %v690 = vunpack.c.h.b16 %v443
      %v691 = vunpack.c.l.b16 %v444
      %v692 = vunpack.c.h.b16 %v444
      %v693 = vunpack.c.l.b16 %v445
      %v694 = vunpack.c.h.b16 %v445
      %v695 = vunpack.c.l.b16 %v446
      %v696 = vunpack.c.h.b16 %v446
      %v697 = vunpack.c.l.b16 %v447
      %v698 = vunpack.c.h.b16 %v447
      %v699 = vunpack.c.l.b16 %v448
      %v700 = vunpack.c.h.b16 %v448
      %v701 = vunpack.c.l.b16 %v449
      %v702 = vunpack.c.h.b16 %v449
      %v703 = vunpack.c.l.b16 %v450
      %v704 = vunpack.c.h.b16 %v450
      %v705 = vunpack.c.l.b16 %v451
      %v706 = vunpack.c.h.b16 %v451
      %v707 = vunpack.c.l.b16 %v452
      %v708 = vunpack.c.h.b16 %v452
      %v709 = vunpack.c.l.b16 %v453
      %v710 = vunpack.c.h.b16 %v453
      %v711 = vunpack.c.l.b16 %v454
      %v712 = vunpack.c.h.b16 %v454
      %v713 = vunpack.c.l.b16 %v455
      %v714 = vunpack.c.h.b16 %v455
      %v715 = vunpack.c.l.b16 %v456
      %v716 = vunpack.c.h.b16 %v456
      %v717 = vunpack.c.l.b16 %v457
      %v718 = vunpack.c.h.b16 %v457
      %v719 = vunpack.c.l.b16 %v458
      %v720 = vunpack.c.h.b16 %v458
      %v721 = vunpack.c.l.b16 %v459
      %v722 = vunpack.c.h.b16 %v459
      %v723 = vunpack.c.l.b16 %v460
      %v724 = vunpack.c.h.b16 %v460
      %v725 = vunpack.c.l.b16 %v461
      %v726 = vunpack.c.h.b16 %v461
      %v727 = vunpack.c.l.b16 %v462
      %v728 = vunpack.c.h.b16 %v462
      %v729 = vunpack.c.l.b16 %v463
      %v730 = vunpack.c.h.b16 %v463
      %v731 = vunpack.c.l.b16 %v464
      %v732 = vunpack.c.h.b16 %v464
      %v733 = vunpack.c.l.b16 %v465
      %v734 = vunpack.c.h.b16 %v465
      %v735 = vunpack.c.l.b16 %v466
      %v736 = vunpack.c.h.b16 %v466
      %v737 = vunpack.c.l.b16 %v467
      %v738 = vunpack.c.h.b16 %v467
      %v739 = vunpack.c.l.b16 %v468
      %v740 = vunpack.c.h.b16 %v468
      %v741 = vunpack.c.l.b16 %v469
      %v742 = vunpack.c.h.b16 %v469
      %v743 = vunpack.c.l.b16 %v470
      %v744 = vunpack.c.h.b16 %v470
      %v745 = vunpack.c.l.b16 %v471
      %v746 = vunpack.c.h.b16 %v471
      %v747 = vunpack.c.l.b16 %v472
      %v748 = vunpack.c.h.b16 %v472
      %v749 = vunpack.c.l.b16 %v473
      %v750 = vunpack.c.h.b16 %v473
      %v751 = vunpack.c.l.b16 %v474
      %v752 = vunpack.c.h.b16 %v474
      %v753 = vunpack.c.l.b16 %v475
      %v754 = vunpack.c.h.b16 %v475
      %v755 = vunpack.c.l.b16 %v476
      %v756 = vunpack.c.h.b16 %v476
      %v757 = vunpack.c.l.b16 %v477
      %v758 = vunpack.c.h.b16 %v477
      %v759 = vunpack.c.l.b16 %v478
      %v760 = vunpack.c.h.b16 %v478
      %v761 = vunpack.c.l.b16 %v479
      %v762 = vunpack.c.h.b16 %v479
      %v763 = vunpack.c.l.b16 %v480
      %v764 = vunpack.c.h.b16 %v480
      %v765 = vunpack.c.l.b16 %v481
      %v766 = vunpack.c.h.b16 %v481
      %v767 = vunpack.c.l.b16 %v482
      %v768 = vunpack.c.h.b16 %v482
      %v769 = vunpack.c.l.b16 %v483
      %v770 = vunpack.c.h.b16 %v483
      %v771 = vunpack.c.l.b16 %v484
      %v772 = vunpack.c.h.b16 %v484
      %v773 = vunpack.c.l.b16 %v485
      %v774 = vunpack.c.h.b16 %v485
      %v775 = vunpack.c.l.b16 %v486
      %v776 = vunpack.c.h.b16 %v486
      %v777 = vunpack.c.l.b16 %v487
      %v778 = vunpack.c.h.b16 %v487
      %v779 = vunpack.c.l.b16 %v488
      %v780 = vunpack.c.h.b16 %v488
      %v781 = vunpack.c.l.b16 %v489
      %v782 = vunpack.c.h.b16 %v489
      %v783 = vunpack.c.l.b16 %v490
      %v784 = vunpack.c.h.b16 %v490
      %v785 = vunpack.c.l.b16 %v491
      %v786 = vunpack.c.h.b16 %v491
      %v787 = vunpack.c.l.b16 %v492
      %v788 = vunpack.c.h.b16 %v492
      %v789 = vunpack.c.l.b16 %v493
      %v790 = vunpack.c.h.b16 %v493
      %v791 = vunpack.c.l.b16 %v494
      %v792 = vunpack.c.h.b16 %v494
      %v793 = vunpack.c.l.b16 %v495
      %v794 = vunpack.c.h.b16 %v495
      %v795 = vunpack.c.l.b16 %v496
      %v796 = vunpack.c.h.b16 %v496
      %v797 = vpack.c.b16 %v607, %v605
      %v798 = vpack.c.b16 %v608, %v606
      %v799 = vpack.c.b16 %v611, %v609
      %v800 = vpack.c.b16 %v612, %v610
      %v801 = vpack.c.b16 %v615, %v613
      %v802 = vpack.c.b16 %v616, %v614
      %v803 = vpack.c.b16 %v619, %v617
      %v804 = vpack.c.b16 %v620, %v618
      %v805 = vpack.c.b16 %v623, %v621
      %v806 = vpack.c.b16 %v624, %v622
      %v807 = vpack.c.b16 %v627, %v625
      %v808 = vpack.c.b16 %v628, %v626
      %v809 = vpack.c.b16 %v631, %v629
      %v810 = vpack.c.b16 %v632, %v630
      %v811 = vpack.c.b16 %v635, %v633
      %v812 = vpack.c.b16 %v636, %v634
      %v813 = vpack.c.b16 %v639, %v637
      %v814 = vpack.c.b16 %v640, %v638
      %v815 = vpack.c.b16 %v643, %v641
      %v816 = vpack.c.b16 %v644, %v642
      %v817 = vpack.c.b16 %v647, %v645
      %v818 = vpack.c.b16 %v648, %v646
      %v819 = vpack.c.b16 %v651, %v649
      %v820 = vpack.c.b16 %v652, %v650
      %v821 = vpack.c.b16 %v655, %v653
      %v822 = vpack.c.b16 %v656, %v654
      %v823 = vpack.c.b16 %v659, %v657
      %v824 = vpack.c.b16 %v660, %v658
      %v825 = vpack.c.b16 %v663, %v661
      %v826 = vpack.c.b16 %v664, %v662
      %v827 = vpack.c.b16 %v667, %v665
      %v828 = vpack.c.b16 %v668, %v666
      %v829 = vpack.c.b16 %v671, %v669
      %v830 = vpack.c.b16 %v672, %v670
      %v831 = vpack.c.b16 %v675, %v673
      %v832 = vpack.c.b16 %v676, %v674
      %v833 = vpack.c.b16 %v679, %v677
      %v834 = vpack.c.b16 %v680, %v678
      %v835 = vpack.c.b16 %v683, %v681
      %v836 = vpack.c.b16 %v684, %v682
      %v837 = vpack.c.b16 %v687, %v685
      %v838 = vpack.c.b16 %v688, %v686
      %v839 = vpack.c.b16 %v691, %v689
      %v840 = vpack.c.b16 %v692, %v690
      %v841 = vpack.c.b16 %v695, %v693
      %v842 = vpack.c.b16 %v696, %v694
      %v843 = vpack.c.b16 %v699, %v697
      %v844 = vpack.c.b16 %v700, %v698
      %v845 = vpack.c.b16 %v703, %v701
      %v846 = vpack.c.b16 %v704, %v702
      %v847 = vpack.c.b16 %v707, %v705
      %v848 = vpack.c.b16 %v708, %v706
      %v849 = vpack.c.b16 %v711, %v709
      %v850 = vpack.c.b16 %v712, %v710
      %v851 = vpack.c.b16 %v715, %v713
      %v852 = vpack.c.b16 %v716, %v714
      %v853 = vpack.c.b16 %v719, %v717
      %v854 = vpack.c.b16 %v720, %v718
      %v855 = vpack.c.b16 %v723, %v721
      %v856 = vpack.c.b16 %v724, %v722
      %v857 = vpack.c.b16 %v727, %v725
      %v858 = vpack.c.b16 %v728, %v726
      %v859 = vpack.c.b16 %v731, %v729
      %v860 = vpack.c.b16 %v732, %v730
      %v861 = vpack.c.b16 %v735, %v733
      %v862 = vpack.c.b16 %v736, %v734
      %v863 = vpack.c.b16 %v739, %v737
      %v864 = vpack.c.b16 %v740, %v738
      %v865 = vpack.c.b16 %v743, %v741
      %v866 = vpack.c.b16 %v744, %v742
      %v867 = vpack.c.b16 %v747, %v745
      %v868 = vpack.c.b16 %v748, %v746
      %v869 = vpack.c.b16 %v751, %v749
      %v870 = vpack.c.b16 %v752, %v750
      %v871 = vpack.c.b16 %v755, %v753
      %v872 = vpack.c.b16 %v756, %v754
      %v873 = vpack.c.b16 %v759, %v757
      %v874 = vpack.c.b16 %v760, %v758
      %v875 = vpack.c.b16 %v763, %v761
      %v876 = vpack.c.b16 %v764, %v762
      %v877 = vpack.c.b16 %v767, %v765
      %v878 = vpack.c.b16 %v768, %v766
      %v879 = vpack.c.b16 %v771, %v769
      %v880 = vpack.c.b16 %v772, %v770
      %v881 = vpack.c.b16 %v775, %v773
      %v882 = vpack.c.b16 %v776, %v774
      %v883 = vpack.c.b16 %v779, %v777
      %v884 = vpack.c.b16 %v780, %v778
      %v885 = vpack.c.b16 %v783, %v781
      %v886 = vpack.c.b16 %v784, %v782
      %v887 = vpack.c.b16 %v787, %v785
      %v888 = vpack.c.b16 %v788, %v786
      %v889 = vpack.c.b16 %v791, %v789
      %v890 = vpack.c.b16 %v792, %v790
      %v891 = vpack.c.b16 %v795, %v793
      %v892 = vpack.c.b16 %v796, %v794
      %989 = vmatprep.subr.bf16.mxu0 %v798
      %990 = vmatpush1.bf16.msra.mxu0 %v797
      %991 = vmatprep.subr.bf16.mxu0 %v800
      %992 = vmatpush1.bf16.msra.mxu0 %v799
      %993 = vmatprep.subr.bf16.mxu0 %v802
      %994 = vmatpush1.bf16.msra.mxu0 %v801
      %995 = vmatprep.subr.bf16.mxu0 %v804
      %996 = vmatpush1.bf16.msra.mxu0 %v803
      %997 = vmatprep.subr.bf16.mxu0 %v806
      %998 = vmatpush1.bf16.msra.mxu0 %v805
      %999 = vmatprep.subr.bf16.mxu0 %v808
      %1000 = vmatpush1.bf16.msra.mxu0 %v807
      %1001 = vmatprep.subr.bf16.mxu0 %v810
      %1002 = vmatpush1.bf16.msra.mxu0 %v809
      %1003 = vmatprep.subr.bf16.mxu0 %v812
      %1004 = vmatpush1.bf16.msra.mxu0 %v811
      %1005 = vmatprep.subr.bf16.mxu0 %v814
      %1006 = vmatpush1.bf16.msra.mxu0 %v813
      %1007 = vmatprep.subr.bf16.mxu0 %v816
      %1008 = vmatpush1.bf16.msra.mxu0 %v815
      %1009 = vmatprep.subr.bf16.mxu0 %v818
      %1010 = vmatpush1.bf16.msra.mxu0 %v817
      %1011 = vmatprep.subr.bf16.mxu0 %v820
      %1012 = vmatpush1.bf16.msra.mxu0 %v819
      %1013 = vmatprep.subr.bf16.mxu0 %v822
      %1014 = vmatpush1.bf16.msra.mxu0 %v821
      %1015 = vmatprep.subr.bf16.mxu0 %v824
      %1016 = vmatpush1.bf16.msra.mxu0 %v823
      %1017 = vmatprep.subr.bf16.mxu0 %v826
      %1018 = vmatpush1.bf16.msra.mxu0 %v825
      %1019 = vmatprep.subr.bf16.mxu0 %v828
      %1020 = vmatpush1.bf16.msra.mxu0 %v827
      %1021 = vmatprep.mubr.bf16.mxu0 %v354
      %1022 = vmatmul.mubr.bf16.gmra.mrb[0].mxu0 %v353
      %v1023 = vpop.f32.mrb[0].mxu0
      %v1024 = vadd.f32 %v502, %v1023
      %v1025 = vpop.f32.mrb[0].mxu0
      %v1026 = vadd.f32 %v506, %v1025
      %v1027 = vpop.f32.mrb[0].mxu0
      %v1028 = vadd.f32 %v502, %v1027
      %v1029 = vpop.f32.mrb[0].mxu0
      %v1030 = vadd.f32 %v506, %v1029
      %1031 = vmatprep.mubr.bf16.mxu0 %v360
      %1032 = vmatmul.mubr.bf16.gmra.mrb[0].mxu0 %v359
      %v1033 = vpop.f32.mrb[0].mxu0
      %v1034 = vadd.f32 %v502, %v1033
      %v1035 = vpop.f32.mrb[0].mxu0
      %v1036 = vadd.f32 %v506, %v1035
      %v1037 = vpop.f32.mrb[0].mxu0
      %v1038 = vadd.f32 %v502, %v1037
      %v1039 = vpop.f32.mrb[0].mxu0
      %v1040 = vadd.f32 %v506, %v1039
      %1041 = vmatprep.mubr.bf16.mxu0 %v366
      %1042 = vmatmul.mubr.bf16.gmra.mrb[0].mxu0 %v365
      %v1043 = vpop.f32.mrb[0].mxu0
      %v1044 = vadd.f32 %v502, %v1043
      %v1045 = vpop.f32.mrb[0].mxu0
      %v1046 = vadd.f32 %v506, %v1045
      %v1047 = vpop.f32.mrb[0].mxu0
      %v1048 = vadd.f32 %v502, %v1047
      %v1049 = vpop.f32.mrb[0].mxu0
      %v1050 = vadd.f32 %v506, %v1049
      %1051 = vmatprep.mubr.bf16.mxu0 %v372
      %1052 = vmatmul.mubr.bf16.gmra.mrb[0].mxu0 %v371
      %v1053 = vpop.f32.mrb[0].mxu0
      %v1054 = vadd.f32 %v502, %v1053
      %v1055 = vpop.f32.mrb[0].mxu0
      %v1056 = vadd.f32 %v506, %v1055
      %v1057 = vpop.f32.mrb[0].mxu0
      %v1058 = vadd.f32 %v502, %v1057
      %v1059 = vpop.f32.mrb[0].mxu0
      %v1060 = vadd.f32 %v506, %v1059
      %1061 = vmatprep.mubr.bf16.mxu0 %v378
      %1062 = vmatmul.mubr.bf16.gmra.mrb[0].mxu0 %v377
      %v1063 = vpop.f32.mrb[0].mxu0
      %v1064 = vadd.f32 %v502, %v1063
      %v1065 = vpop.f32.mrb[0].mxu0
      %v1066 = vadd.f32 %v506, %v1065
      %v1067 = vpop.f32.mrb[0].mxu0
      %v1068 = vadd.f32 %v502, %v1067
      %v1069 = vpop.f32.mrb[0].mxu0
      %v1070 = vadd.f32 %v506, %v1069
      %1071 = vmatprep.mubr.bf16.mxu0 %v384
      %1072 = vmatmul.mubr.bf16.gmra.mrb[0].mxu0 %v383
      %v1073 = vpop.f32.mrb[0].mxu0
      %v1074 = vadd.f32 %v502, %v1073
      %v1075 = vpop.f32.mrb[0].mxu0
      %v1076 = vadd.f32 %v506, %v1075
      %v1077 = vpop.f32.mrb[0].mxu0
      %v1078 = vadd.f32 %v502, %v1077
      %v1079 = vpop.f32.mrb[0].mxu0
      %v1080 = vadd.f32 %v506, %v1079
      %1081 = vmatprep.mubr.bf16.mxu0 %v390
      %1082 = vmatmul.mubr.bf16.gmra.mrb[0].mxu0 %v389
      %v1083 = vpop.f32.mrb[0].mxu0
      %v1084 = vadd.f32 %v502, %v1083
      %v1085 = vpop.f32.mrb[0].mxu0
      %v1086 = vadd.f32 %v506, %v1085
      %v1087 = vpop.f32.mrb[0].mxu0
      %v1088 = vadd.f32 %v502, %v1087
      %v1089 = vpop.f32.mrb[0].mxu0
      %v1090 = vadd.f32 %v506, %v1089
      %1091 = vmatprep.mubr.bf16.mxu0 %v396
      %1092 = vmatmul.mubr.bf16.gmra.mrb[0].mxu0 %v395
      %v1093 = vpop.f32.mrb[0].mxu0
      %v1094 = vadd.f32 %v502, %v1093
      %v1095 = vpop.f32.mrb[0].mxu0
      %v1096 = vadd.f32 %v506, %v1095
      %v1097 = vpop.f32.mrb[0].mxu0
      %v1098 = vadd.f32 %v502, %v1097
      %v1099 = vpop.f32.mrb[0].mxu0
      %v1100 = vadd.f32 %v506, %v1099
      %1101 = vdwg.mxu0
      %1102 = vmatprep.subr.bf16.mxu0 %v830
      %1103 = vmatpush1.bf16.msra.mxu0 %v829
      %1104 = vmatprep.subr.bf16.mxu0 %v832
      %1105 = vmatpush1.bf16.msra.mxu0 %v831
      %1106 = vmatprep.subr.bf16.mxu0 %v834
      %1107 = vmatpush1.bf16.msra.mxu0 %v833
      %1108 = vmatprep.subr.bf16.mxu0 %v836
      %1109 = vmatpush1.bf16.msra.mxu0 %v835
      %1110 = vmatprep.subr.bf16.mxu0 %v838
      %1111 = vmatpush1.bf16.msra.mxu0 %v837
      %1112 = vmatprep.subr.bf16.mxu0 %v840
      %1113 = vmatpush1.bf16.msra.mxu0 %v839
      %1114 = vmatprep.subr.bf16.mxu0 %v842
      %1115 = vmatpush1.bf16.msra.mxu0 %v841
      %1116 = vmatprep.subr.bf16.mxu0 %v844
      %1117 = vmatpush1.bf16.msra.mxu0 %v843
      %1118 = vmatprep.subr.bf16.mxu0 %v846
      %1119 = vmatpush1.bf16.msra.mxu0 %v845
      %1120 = vmatprep.subr.bf16.mxu0 %v848
      %1121 = vmatpush1.bf16.msra.mxu0 %v847
      %1122 = vmatprep.subr.bf16.mxu0 %v850
      %1123 = vmatpush1.bf16.msra.mxu0 %v849
      %1124 = vmatprep.subr.bf16.mxu0 %v852
      %1125 = vmatpush1.bf16.msra.mxu0 %v851
      %1126 = vmatprep.subr.bf16.mxu0 %v854
      %1127 = vmatpush1.bf16.msra.mxu0 %v853
      %1128 = vmatprep.subr.bf16.mxu0 %v856
      %1129 = vmatpush1.bf16.msra.mxu0 %v855
      %1130 = vmatprep.subr.bf16.mxu0 %v858
      %1131 = vmatpush1.bf16.msra.mxu0 %v857
      %1132 = vmatprep.subr.bf16.mxu0 %v860
      %1133 = vmatpush1.bf16.msra.mxu0 %v859
      %1134 = vmatprep.mubr.bf16.mxu0 %v356
      %1135 = vmatmul.mubr.bf16.gmra.mrb[0].mxu0 %v355
      %v1136 = vpop.f32.mrb[0].mxu0
      %v1137 = vadd.f32 %v1024, %v1136
      %v1138 = vpop.f32.mrb[0].mxu0
      %v1139 = vadd.f32 %v1026, %v1138
      %v1140 = vpop.f32.mrb[0].mxu0
      %v1141 = vadd.f32 %v1028, %v1140
      %v1142 = vpop.f32.mrb[0].mxu0
      %v1143 = vadd.f32 %v1030, %v1142
      %1144 = vmatprep.mubr.bf16.mxu0 %v362
      %1145 = vmatmul.mubr.bf16.gmra.mrb[0].mxu0 %v361
      %v1146 = vpop.f32.mrb[0].mxu0
      %v1147 = vadd.f32 %v1034, %v1146
      %v1148 = vpop.f32.mrb[0].mxu0
      %v1149 = vadd.f32 %v1036, %v1148
      %v1150 = vpop.f32.mrb[0].mxu0
      %v1151 = vadd.f32 %v1038, %v1150
      %v1152 = vpop.f32.mrb[0].mxu0
      %v1153 = vadd.f32 %v1040, %v1152
      %1154 = vmatprep.mubr.bf16.mxu0 %v368
      %1155 = vmatmul.mubr.bf16.gmra.mrb[0].mxu0 %v367
      %v1156 = vpop.f32.mrb[0].mxu0
      %v1157 = vadd.f32 %v1044, %v1156
      %v1158 = vpop.f32.mrb[0].mxu0
      %v1159 = vadd.f32 %v1046, %v1158
      %v1160 = vpop.f32.mrb[0].mxu0
      %v1161 = vadd.f32 %v1048, %v1160
      %v1162 = vpop.f32.mrb[0].mxu0
      %v1163 = vadd.f32 %v1050, %v1162
      %1164 = vmatprep.mubr.bf16.mxu0 %v374
      %1165 = vmatmul.mubr.bf16.gmra.mrb[0].mxu0 %v373
      %v1166 = vpop.f32.mrb[0].mxu0
      %v1167 = vadd.f32 %v1054, %v1166
      %v1168 = vpop.f32.mrb[0].mxu0
      %v1169 = vadd.f32 %v1056, %v1168
      %v1170 = vpop.f32.mrb[0].mxu0
      %v1171 = vadd.f32 %v1058, %v1170
      %v1172 = vpop.f32.mrb[0].mxu0
      %v1173 = vadd.f32 %v1060, %v1172
      %1174 = vmatprep.mubr.bf16.mxu0 %v380
      %1175 = vmatmul.mubr.bf16.gmra.mrb[0].mxu0 %v379
      %v1176 = vpop.f32.mrb[0].mxu0
      %v1177 = vadd.f32 %v1064, %v1176
      %v1178 = vpop.f32.mrb[0].mxu0
      %v1179 = vadd.f32 %v1066, %v1178
      %v1180 = vpop.f32.mrb[0].mxu0
      %v1181 = vadd.f32 %v1068, %v1180
      %v1182 = vpop.f32.mrb[0].mxu0
      %v1183 = vadd.f32 %v1070, %v1182
      %1184 = vmatprep.mubr.bf16.mxu0 %v386
      %1185 = vmatmul.mubr.bf16.gmra.mrb[0].mxu0 %v385
      %v1186 = vpop.f32.mrb[0].mxu0
      %v1187 = vadd.f32 %v1074, %v1186
      %v1188 = vpop.f32.mrb[0].mxu0
      %v1189 = vadd.f32 %v1076, %v1188
      %v1190 = vpop.f32.mrb[0].mxu0
      %v1191 = vadd.f32 %v1078, %v1190
      %v1192 = vpop.f32.mrb[0].mxu0
      %v1193 = vadd.f32 %v1080, %v1192
      %1194 = vmatprep.mubr.bf16.mxu0 %v392
      %1195 = vmatmul.mubr.bf16.gmra.mrb[0].mxu0 %v391
      %v1196 = vpop.f32.mrb[0].mxu0
      %v1197 = vadd.f32 %v1084, %v1196
      %v1198 = vpop.f32.mrb[0].mxu0
      %v1199 = vadd.f32 %v1086, %v1198
      %v1200 = vpop.f32.mrb[0].mxu0
      %v1201 = vadd.f32 %v1088, %v1200
      %v1202 = vpop.f32.mrb[0].mxu0
      %v1203 = vadd.f32 %v1090, %v1202
      %1204 = vmatprep.mubr.bf16.mxu0 %v398
      %1205 = vmatmul.mubr.bf16.gmra.mrb[0].mxu0 %v397
      %v1206 = vpop.f32.mrb[0].mxu0
      %v1207 = vadd.f32 %v1094, %v1206
      %v1208 = vpop.f32.mrb[0].mxu0
      %v1209 = vadd.f32 %v1096, %v1208
      %v1210 = vpop.f32.mrb[0].mxu0
      %v1211 = vadd.f32 %v1098, %v1210
      %v1212 = vpop.f32.mrb[0].mxu0
      %v1213 = vadd.f32 %v1100, %v1212
      %1214 = vdwg.mxu0
      %1215 = vmatprep.subr.bf16.mxu0 %v862
      %1216 = vmatpush1.bf16.msra.mxu0 %v861
      %1217 = vmatprep.subr.bf16.mxu0 %v864
      %1218 = vmatpush1.bf16.msra.mxu0 %v863
      %1219 = vmatprep.subr.bf16.mxu0 %v866
      %1220 = vmatpush1.bf16.msra.mxu0 %v865
      %1221 = vmatprep.subr.bf16.mxu0 %v868
      %1222 = vmatpush1.bf16.msra.mxu0 %v867
      %1223 = vmatprep.subr.bf16.mxu0 %v870
      %1224 = vmatpush1.bf16.msra.mxu0 %v869
      %1225 = vmatprep.subr.bf16.mxu0 %v872
      %1226 = vmatpush1.bf16.msra.mxu0 %v871
      %1227 = vmatprep.subr.bf16.mxu0 %v874
      %1228 = vmatpush1.bf16.msra.mxu0 %v873
      %1229 = vmatprep.subr.bf16.mxu0 %v876
      %1230 = vmatpush1.bf16.msra.mxu0 %v875
      %1231 = vmatprep.subr.bf16.mxu0 %v878
      %1232 = vmatpush1.bf16.msra.mxu0 %v877
      %1233 = vmatprep.subr.bf16.mxu0 %v880
      %1234 = vmatpush1.bf16.msra.mxu0 %v879
      %1235 = vmatprep.subr.bf16.mxu0 %v882
      %1236 = vmatpush1.bf16.msra.mxu0 %v881
      %1237 = vmatprep.subr.bf16.mxu0 %v884
      %1238 = vmatpush1.bf16.msra.mxu0 %v883
      %1239 = vmatprep.subr.bf16.mxu0 %v886
      %1240 = vmatpush1.bf16.msra.mxu0 %v885
      %1241 = vmatprep.subr.bf16.mxu0 %v888
      %1242 = vmatpush1.bf16.msra.mxu0 %v887
      %1243 = vmatprep.subr.bf16.mxu0 %v890
      %1244 = vmatpush1.bf16.msra.mxu0 %v889
      %1245 = vmatprep.subr.bf16.mxu0 %v892
      %1246 = vmatpush1.bf16.msra.mxu0 %v891
      %1247 = vmatprep.mubr.bf16.mxu0 %v358
      %1248 = vmatmul.mubr.bf16.gmra.mrb[0].mxu0 %v357
      %v1249 = vpop.f32.mrb[0].mxu0
      %v1250 = vadd.f32 %v1137, %v1249
      %v1251 = vpop.f32.mrb[0].mxu0
      %v1252 = vadd.f32 %v1139, %v1251
      %v1253 = vpop.f32.mrb[0].mxu0
      %v1254 = vadd.f32 %v1141, %v1253
      %v1255 = vpop.f32.mrb[0].mxu0
      %v1256 = vadd.f32 %v1143, %v1255
      %1257 = vmatprep.mubr.bf16.mxu0 %v364
      %1258 = vmatmul.mubr.bf16.gmra.mrb[0].mxu0 %v363
      %v1259 = vpop.f32.mrb[0].mxu0
      %v1260 = vadd.f32 %v1147, %v1259
      %v1261 = vpop.f32.mrb[0].mxu0
      %v1262 = vadd.f32 %v1149, %v1261
      %v1263 = vpop.f32.mrb[0].mxu0
      %v1264 = vadd.f32 %v1151, %v1263
      %v1265 = vpop.f32.mrb[0].mxu0
      %v1266 = vadd.f32 %v1153, %v1265
      %1267 = vmatprep.mubr.bf16.mxu0 %v370
      %1268 = vmatmul.mubr.bf16.gmra.mrb[0].mxu0 %v369
      %v1269 = vpop.f32.mrb[0].mxu0
      %v1270 = vadd.f32 %v1157, %v1269
      %v1271 = vpop.f32.mrb[0].mxu0
      %v1272 = vadd.f32 %v1159, %v1271
      %v1273 = vpop.f32.mrb[0].mxu0
      %v1274 = vadd.f32 %v1161, %v1273
      %v1275 = vpop.f32.mrb[0].mxu0
      %v1276 = vadd.f32 %v1163, %v1275
      %1277 = vmatprep.mubr.bf16.mxu0 %v376
      %1278 = vmatmul.mubr.bf16.gmra.mrb[0].mxu0 %v375
      %v1279 = vpop.f32.mrb[0].mxu0
      %v1280 = vadd.f32 %v1167, %v1279
      %v1281 = vpop.f32.mrb[0].mxu0
      %v1282 = vadd.f32 %v1169, %v1281
      %v1283 = vpop.f32.mrb[0].mxu0
      %v1284 = vadd.f32 %v1171, %v1283
      %v1285 = vpop.f32.mrb[0].mxu0
      %v1286 = vadd.f32 %v1173, %v1285
      %1287 = vmatprep.mubr.bf16.mxu0 %v382
      %1288 = vmatmul.mubr.bf16.gmra.mrb[0].mxu0 %v381
      %v1289 = vpop.f32.mrb[0].mxu0
      %v1290 = vadd.f32 %v1177, %v1289
      %v1291 = vpop.f32.mrb[0].mxu0
      %v1292 = vadd.f32 %v1179, %v1291
      %v1293 = vpop.f32.mrb[0].mxu0
      %v1294 = vadd.f32 %v1181, %v1293
      %v1295 = vpop.f32.mrb[0].mxu0
      %v1296 = vadd.f32 %v1183, %v1295
      %1297 = vmatprep.mubr.bf16.mxu0 %v388
      %1298 = vmatmul.mubr.bf16.gmra.mrb[0].mxu0 %v387
      %v1299 = vpop.f32.mrb[0].mxu0
      %v1300 = vadd.f32 %v1187, %v1299
      %v1301 = vpop.f32.mrb[0].mxu0
      %v1302 = vadd.f32 %v1189, %v1301
      %v1303 = vpop.f32.mrb[0].mxu0
      %v1304 = vadd.f32 %v1191, %v1303
      %v1305 = vpop.f32.mrb[0].mxu0
      %v1306 = vadd.f32 %v1193, %v1305
      %1307 = vmatprep.mubr.bf16.mxu0 %v394
      %1308 = vmatmul.mubr.bf16.gmra.mrb[0].mxu0 %v393
      %v1309 = vpop.f32.mrb[0].mxu0
      %v1310 = vadd.f32 %v1197, %v1309
      %v1311 = vpop.f32.mrb[0].mxu0
      %v1312 = vadd.f32 %v1199, %v1311
      %v1313 = vpop.f32.mrb[0].mxu0
      %v1314 = vadd.f32 %v1201, %v1313
      %v1315 = vpop.f32.mrb[0].mxu0
      %v1316 = vadd.f32 %v1203, %v1315
      %1317 = vmatprep.mubr.bf16.mxu0 %v400
      %1318 = vmatmul.mubr.bf16.gmra.mrb[0].mxu0 %v399
      %v1319 = vpop.f32.mrb[0].mxu0
      %v1320 = vadd.f32 %v1207, %v1319
      %v1321 = vpop.f32.mrb[0].mxu0
      %v1322 = vadd.f32 %v1209, %v1321
      %v1323 = vpop.f32.mrb[0].mxu0
      %v1324 = vadd.f32 %v1211, %v1323
      %v1325 = vpop.f32.mrb[0].mxu0
      %v1326 = vadd.f32 %v1213, %v1325
      %1327 = vdwg.mxu0
      %v1328 = vmax.f32 %v1250, 0.0
      %v1329 = vmax.f32 %v1252, 0.0
      %v1330 = vmax.f32 %v1254, 0.0
      %v1331 = vmax.f32 %v1256, 0.0
      %v1332 = vmax.f32 %v1260, 0.0
      %v1333 = vmax.f32 %v1262, 0.0
      %v1334 = vmax.f32 %v1264, 0.0
      %v1335 = vmax.f32 %v1266, 0.0
      %v1336 = vmax.f32 %v1270, 0.0
      %v1337 = vmax.f32 %v1272, 0.0
      %v1338 = vmax.f32 %v1274, 0.0
      %v1339 = vmax.f32 %v1276, 0.0
      %v1340 = vmax.f32 %v1280, 0.0
      %v1341 = vmax.f32 %v1282, 0.0
      %v1342 = vmax.f32 %v1284, 0.0
      %v1343 = vmax.f32 %v1286, 0.0
      %v1344 = vmax.f32 %v1290, 0.0
      %v1345 = vmax.f32 %v1292, 0.0
      %v1346 = vmax.f32 %v1294, 0.0
      %v1347 = vmax.f32 %v1296, 0.0
      %v1348 = vmax.f32 %v1300, 0.0
      %v1349 = vmax.f32 %v1302, 0.0
      %v1350 = vmax.f32 %v1304, 0.0
      %v1351 = vmax.f32 %v1306, 0.0
      %v1352 = vmax.f32 %v1310, 0.0
      %v1353 = vmax.f32 %v1312, 0.0
      %v1354 = vmax.f32 %v1314, 0.0
      %v1355 = vmax.f32 %v1316, 0.0
      %v1356 = vmax.f32 %v1320, 0.0
      %v1357 = vmax.f32 %v1322, 0.0
      %v1358 = vmax.f32 %v1324, 0.0
      %v1359 = vmax.f32 %v1326, 0.0
      %v1360 = vpack.c.bf16 %v1330, %v1328
      %v1361 = vpack.c.bf16 %v1331, %v1329
      %v1362 = vpack.c.bf16 %v1334, %v1332
      %v1363 = vpack.c.bf16 %v1335, %v1333
      %v1364 = vpack.c.bf16 %v1338, %v1336
      %v1365 = vpack.c.bf16 %v1339, %v1337
      %v1366 = vpack.c.bf16 %v1342, %v1340
      %v1367 = vpack.c.bf16 %v1343, %v1341
      %v1368 = vpack.c.bf16 %v1346, %v1344
      %v1369 = vpack.c.bf16 %v1347, %v1345
      %v1370 = vpack.c.bf16 %v1350, %v1348
      %v1371 = vpack.c.bf16 %v1351, %v1349
      %v1372 = vpack.c.bf16 %v1354, %v1352
      %v1373 = vpack.c.bf16 %v1355, %v1353
      %v1374 = vpack.c.bf16 %v1358, %v1356
      %v1375 = vpack.c.bf16 %v1359, %v1357
      %v1376 = vld [vmem:[%s3] sm:$0xf]
      %v1377 = vld [vmem:[%s3 + $0x4] sm:$0xf]
      %v1378 = vld [vmem:[%s3 + $0x8] sm:$0xf]
      %v1379 = vld [vmem:[%s3 + $0xc] sm:$0xf]
      %v1380 = vld [vmem:[%s3 + $0x10] sm:$0xf]
      %v1381 = vld [vmem:[%s3 + $0x14] sm:$0xf]
      %v1382 = vld [vmem:[%s3 + $0x18] sm:$0xf]
      %v1383 = vld [vmem:[%s3 + $0x1c] sm:$0xf]
      %v1384 = vld [vmem:[%s3 + $0x20] sm:$0xf]
      %v1385 = vld [vmem:[%s3 + $0x24] sm:$0xf]
      %v1386 = vld [vmem:[%s3 + $0x28] sm:$0xf]
      %v1387 = vld [vmem:[%s3 + $0x2c] sm:$0xf]
      %v1388 = vld [vmem:[%s3 + $0x30] sm:$0xf]
      %v1389 = vld [vmem:[%s3 + $0x34] sm:$0xf]
      %v1390 = vld [vmem:[%s3 + $0x38] sm:$0xf]
      %v1391 = vld [vmem:[%s3 + $0x3c] sm:$0xf]
      %v1392 = vld [vmem:[%s3 + $0x40] sm:$0xf]
      %v1393 = vld [vmem:[%s3 + $0x44] sm:$0xf]
      %v1394 = vld [vmem:[%s3 + $0x48] sm:$0xf]
      %v1395 = vld [vmem:[%s3 + $0x4c] sm:$0xf]
      %v1396 = vld [vmem:[%s3 + $0x50] sm:$0xf]
      %v1397 = vld [vmem:[%s3 + $0x54] sm:$0xf]
      %v1398 = vld [vmem:[%s3 + $0x58] sm:$0xf]
      %v1399 = vld [vmem:[%s3 + $0x5c] sm:$0xf]
      %v1400 = vld [vmem:[%s3 + $0x60] sm:$0xf]
      %v1401 = vld [vmem:[%s3 + $0x64] sm:$0xf]
      %v1402 = vld [vmem:[%s3 + $0x68] sm:$0xf]
      %v1403 = vld [vmem:[%s3 + $0x6c] sm:$0xf]
      %v1404 = vld [vmem:[%s3 + $0x70] sm:$0xf]
      %v1405 = vld [vmem:[%s3 + $0x74] sm:$0xf]
      %v1406 = vld [vmem:[%s3 + $0x78] sm:$0xf]
      %v1407 = vld [vmem:[%s3 + $0x7c] sm:$0xf]
      %v1408 = vld [vmem:[%s4] sm:$0x1]
      %v1410 = vlaneseq
      %v1411 = vshrl.u32 %v1410, 7
      %v1412 = vsub.s32 0, %v1411
      %v1413 = vrot.slane %v1408, %v1412
      %v1447 = vunpack.c.l.b16 %v1376
      %v1448 = vunpack.c.l.b16 %v1377
      %v1449 = vunpack.c.l.b16 %v1378
      %v1450 = vunpack.c.l.b16 %v1379
      %v1451 = vunpack.c.l.b16 %v1380
      %v1452 = vunpack.c.l.b16 %v1381
      %v1453 = vunpack.c.l.b16 %v1382
      %v1454 = vunpack.c.l.b16 %v1383
      %v1455 = vunpack.c.l.b16 %v1384
      %v1456 = vunpack.c.l.b16 %v1385
      %v1457 = vunpack.c.l.b16 %v1386
      %v1458 = vunpack.c.l.b16 %v1387
      %v1459 = vunpack.c.l.b16 %v1388
      %v1460 = vunpack.c.l.b16 %v1389
      %v1461 = vunpack.c.l.b16 %v1390
      %v1462 = vunpack.c.l.b16 %v1391
      %v1463 = vunpack.c.l.b16 %v1392
      %v1464 = vunpack.c.l.b16 %v1393
      %v1465 = vunpack.c.l.b16 %v1394
      %v1466 = vunpack.c.l.b16 %v1395
      %v1467 = vunpack.c.l.b16 %v1396
      %v1468 = vunpack.c.l.b16 %v1397
      %v1469 = vunpack.c.l.b16 %v1398
      %v1470 = vunpack.c.l.b16 %v1399
      %v1471 = vunpack.c.l.b16 %v1400
      %v1472 = vunpack.c.l.b16 %v1401
      %v1473 = vunpack.c.l.b16 %v1402
      %v1474 = vunpack.c.l.b16 %v1403
      %v1475 = vunpack.c.l.b16 %v1404
      %v1476 = vunpack.c.l.b16 %v1405
      %v1477 = vunpack.c.l.b16 %v1406
      %v1478 = vunpack.c.l.b16 %v1407
      %v1479 = vpack.c.b16 %v1448, %v1447
      %v1480 = vpack.c.b16 %v1450, %v1449
      %v1481 = vpack.c.b16 %v1452, %v1451
      %v1482 = vpack.c.b16 %v1454, %v1453
      %v1483 = vpack.c.b16 %v1456, %v1455
      %v1484 = vpack.c.b16 %v1458, %v1457
      %v1485 = vpack.c.b16 %v1460, %v1459
      %v1486 = vpack.c.b16 %v1462, %v1461
      %v1487 = vpack.c.b16 %v1464, %v1463
      %v1488 = vpack.c.b16 %v1466, %v1465
      %v1489 = vpack.c.b16 %v1468, %v1467
      %v1490 = vpack.c.b16 %v1470, %v1469
      %v1491 = vpack.c.b16 %v1472, %v1471
      %v1492 = vpack.c.b16 %v1474, %v1473
      %v1493 = vpack.c.b16 %v1476, %v1475
      %v1494 = vpack.c.b16 %v1478, %v1477
      %1511 = vmatprep.subr.bf16.mxu0 0
      %1512 = vmatpush1.bf16.msra.mxu0 %v1479
      %1513 = vmatprep.subr.bf16.mxu0 0
      %1514 = vmatpush1.bf16.msra.mxu0 %v1480
      %1515 = vmatprep.subr.bf16.mxu0 0
      %1516 = vmatpush1.bf16.msra.mxu0 %v1481
      %1517 = vmatprep.subr.bf16.mxu0 0
      %1518 = vmatpush1.bf16.msra.mxu0 %v1482
      %1519 = vmatprep.subr.bf16.mxu0 0
      %1520 = vmatpush1.bf16.msra.mxu0 %v1483
      %1521 = vmatprep.subr.bf16.mxu0 0
      %1522 = vmatpush1.bf16.msra.mxu0 %v1484
      %1523 = vmatprep.subr.bf16.mxu0 0
      %1524 = vmatpush1.bf16.msra.mxu0 %v1485
      %1525 = vmatprep.subr.bf16.mxu0 0
      %1526 = vmatpush1.bf16.msra.mxu0 %v1486
      %1527 = vmatprep.subr.bf16.mxu0 0
      %1528 = vmatpush1.bf16.msra.mxu0 %v1487
      %1529 = vmatprep.subr.bf16.mxu0 0
      %1530 = vmatpush1.bf16.msra.mxu0 %v1488
      %1531 = vmatprep.subr.bf16.mxu0 0
      %1532 = vmatpush1.bf16.msra.mxu0 %v1489
      %1533 = vmatprep.subr.bf16.mxu0 0
      %1534 = vmatpush1.bf16.msra.mxu0 %v1490
      %1535 = vmatprep.subr.bf16.mxu0 0
      %1536 = vmatpush1.bf16.msra.mxu0 %v1491
      %1537 = vmatprep.subr.bf16.mxu0 0
      %1538 = vmatpush1.bf16.msra.mxu0 %v1492
      %1539 = vmatprep.subr.bf16.mxu0 0
      %1540 = vmatpush1.bf16.msra.mxu0 %v1493
      %1541 = vmatprep.subr.bf16.mxu0 0
      %1542 = vmatpush1.bf16.msra.mxu0 %v1494
      %1543 = vmatprep.mubr.bf16.mxu0 %v1361
      %1544 = vmatmul.mubr.bf16.gmra.mrb[0].mxu0 %v1360
      %v1545 = vpop.f32.mrb[0].mxu0
      %v1546 = vadd.f32 %v1413, %v1545
      %v1547 = vpop.f32.mrb[0].mxu0
      %v1548 = vpop.f32.mrb[0].mxu0
      %v1549 = vadd.f32 %v1413, %v1548
      %v1550 = vpop.f32.mrb[0].mxu0
      %1551 = vmatprep.mubr.bf16.mxu0 %v1363
      %1552 = vmatmul.mubr.bf16.gmra.mrb[0].mxu0 %v1362
      %v1553 = vpop.f32.mrb[0].mxu0
      %v1554 = vadd.f32 %v1413, %v1553
      %v1555 = vpop.f32.mrb[0].mxu0
      %v1556 = vpop.f32.mrb[0].mxu0
      %v1557 = vadd.f32 %v1413, %v1556
      %v1558 = vpop.f32.mrb[0].mxu0
      %1559 = vmatprep.mubr.bf16.mxu0 %v1365
      %1560 = vmatmul.mubr.bf16.gmra.mrb[0].mxu0 %v1364
      %v1561 = vpop.f32.mrb[0].mxu0
      %v1562 = vadd.f32 %v1413, %v1561
      %v1563 = vpop.f32.mrb[0].mxu0
      %v1564 = vpop.f32.mrb[0].mxu0
      %v1565 = vadd.f32 %v1413, %v1564
      %v1566 = vpop.f32.mrb[0].mxu0
      %1567 = vmatprep.mubr.bf16.mxu0 %v1367
      %1568 = vmatmul.mubr.bf16.gmra.mrb[0].mxu0 %v1366
      %v1569 = vpop.f32.mrb[0].mxu0
      %v1570 = vadd.f32 %v1413, %v1569
      %v1571 = vpop.f32.mrb[0].mxu0
      %v1572 = vpop.f32.mrb[0].mxu0
      %v1573 = vadd.f32 %v1413, %v1572
      %v1574 = vpop.f32.mrb[0].mxu0
      %1575 = vmatprep.mubr.bf16.mxu0 %v1369
      %1576 = vmatmul.mubr.bf16.gmra.mrb[0].mxu0 %v1368
      %v1577 = vpop.f32.mrb[0].mxu0
      %v1578 = vadd.f32 %v1413, %v1577
      %v1579 = vpop.f32.mrb[0].mxu0
      %v1580 = vpop.f32.mrb[0].mxu0
      %v1581 = vadd.f32 %v1413, %v1580
      %v1582 = vpop.f32.mrb[0].mxu0
      %1583 = vmatprep.mubr.bf16.mxu0 %v1371
      %1584 = vmatmul.mubr.bf16.gmra.mrb[0].mxu0 %v1370
      %v1585 = vpop.f32.mrb[0].mxu0
      %v1586 = vadd.f32 %v1413, %v1585
      %v1587 = vpop.f32.mrb[0].mxu0
      %v1588 = vpop.f32.mrb[0].mxu0
      %v1589 = vadd.f32 %v1413, %v1588
      %v1590 = vpop.f32.mrb[0].mxu0
      %1591 = vmatprep.mubr.bf16.mxu0 %v1373
      %1592 = vmatmul.mubr.bf16.gmra.mrb[0].mxu0 %v1372
      %v1593 = vpop.f32.mrb[0].mxu0
      %v1594 = vadd.f32 %v1413, %v1593
      %v1595 = vpop.f32.mrb[0].mxu0
      %v1596 = vpop.f32.mrb[0].mxu0
      %v1597 = vadd.f32 %v1413, %v1596
      %v1598 = vpop.f32.mrb[0].mxu0
      %1599 = vmatprep.mubr.bf16.mxu0 %v1375
      %1600 = vmatmul.mubr.bf16.gmra.mrb[0].mxu0 %v1374
      %v1601 = vpop.f32.mrb[0].mxu0
      %v1602 = vadd.f32 %v1413, %v1601
      %v1603 = vpop.f32.mrb[0].mxu0
      %v1604 = vpop.f32.mrb[0].mxu0
      %v1605 = vadd.f32 %v1413, %v1604
      %v1606 = vpop.f32.mrb[0].mxu0
      %1607 = vdwg.mxu0
      %1608 = vst [vmem:[%s254] sm:$0xff] %v1546
      %1609 = vst [vmem:[%s254 + $0x8] sm:$0xff] %v1549
      %1610 = vst [vmem:[%s254 + $0x10] sm:$0xff] %v1554
      %1611 = vst [vmem:[%s254 + $0x18] sm:$0xff] %v1557
      %1612 = vst [vmem:[%s254 + $0x20] sm:$0xff] %v1562
      %1613 = vst [vmem:[%s254 + $0x28] sm:$0xff] %v1565
      %1614 = vst [vmem:[%s254 + $0x30] sm:$0xff] %v1570
      %1615 = vst [vmem:[%s254 + $0x38] sm:$0xff] %v1573
      %1616 = vst [vmem:[%s254 + $0x40] sm:$0xff] %v1578
      %1617 = vst [vmem:[%s254 + $0x48] sm:$0xff] %v1581
      %1618 = vst [vmem:[%s254 + $0x50] sm:$0xff] %v1586
      %1619 = vst [vmem:[%s254 + $0x58] sm:$0xff] %v1589
      %1620 = vst [vmem:[%s254 + $0x60] sm:$0xff] %v1594
      %1621 = vst [vmem:[%s254 + $0x68] sm:$0xff] %v1597
      %1622 = vst [vmem:[%s254 + $0x70] sm:$0xff] %v1602
      %1623 = vst [vmem:[%s254 + $0x78] sm:$0xff] %v1605
      %s1624 = smul.u32 16, %s16
      %p1625 = scmp.lt.s32.totalorder %s1624, 63
      %s1626 = scalar_select %p1625, %s1624, 63
      %s1627 = smul.addr %s1626, 8
      %s1628 = scalar_lea.vmem %s5, %s1627
      // Predicated region
      $region41: #{phi_forward.1} parent=39 // pred_check
        %p1629 = pneg %p144
      $region42: #{phi_forward.1} parent=39 // pred_check_branch
        %1631 = sbr.rel (%p1629) target = $region44
      $region43: #{phi_forward.1} parent=39 // pred_region
        %s1632 = smul.u32 16, %s16
      $region44: #{phi_forward.1} parent=39 // pred_fallthru
        _
    $region40: #{phi_forward.1} parent=5 // pred_fallthru
      _
    %p1633 = scmp.le.s32.totalorder 2, %s11
    // Predicated region
    $region45: #{phi_forward.1} parent=5 // pred_check
      %p1634 = pneg %p1633
    $region46: #{phi_forward.1} parent=5 // pred_check_branch
      %1636 = sbr.rel (%p1634) target = $region48
    $region47: #{phi_forward.1} parent=5 // pred_region
      %s1637 = ssub.s32 %s11, 2
      // Predicated region
      $region49: #{phi_forward.1} parent=47 // pred_check
        %p1638 = pneg %p150
      $region50: #{phi_forward.1} parent=47 // pred_check_branch
        %1640 = sbr.rel (%p1638) target = $region52
      $region51: #{phi_forward.1} parent=47 // pred_region
        %s1641 = smul.u32 16, %s17
        %p1642 = scmp.lt.s32.totalorder %s1641, 63
        %s1643 = scalar_select %p1642, %s1641, 63
        %s1644 = smul.addr %s1643, 8
        %s1645 = scalar_lea.vmem %s5, %s1644
      $region52: #{phi_forward.1} parent=47 // pred_fallthru
        _
    $region48: #{phi_forward.1} parent=5 // pred_fallthru
      _
  $region6: #{phi_forward.1} parent=0 // loop_footer
    %s15 = sadd.s32 1, %s11
  $region7: #{phi_forward.1} parent=0 // loop_footer_branch
    %10 = sbr.rel target = $region3
  $region8: #{phi_forward.1} parent=0 // loop_exit
    _

</llo_original>
